<compile_context>
chip_gen: v6e
topology: v6e:2x2x1
jax: 0.10.0
libtpu: 0.0.40
codegen_flags: <defaults>
</compile_context>

<pallas_src>
import jax
import jax.numpy as jnp
from jax import lax
from jax.experimental import pallas as pl
from jax.experimental.pallas import tpu as pltpu

EPS = 1e-5


def conv1x1_bn_kernel(x_ref, w_ref, gamma_ref, beta_ref, o_ref):
    # x_ref:     (N, Cin, HW)  bf16
    # w_ref:     (Cout, Cin)   bf16
    # gamma_ref: (Cout, 1)     f32
    # beta_ref:  (Cout, 1)     f32
    # o_ref:     (N, Cout, HW) f32
    n_batch, _, hw = x_ref.shape
    cout = w_ref.shape[0]

    w = w_ref[...]  # (Cout, Cin) bf16

    s = jnp.zeros((cout, 1), jnp.float32)
    ss = jnp.zeros((cout, 1), jnp.float32)

    # Pass 1: conv (MXU, bf16 inputs, f32 accumulation) + fused sum / sum-of-squares.
    for n in range(n_batch):  # static unroll; N is tiny (module uses N=1)
        y_n = jnp.dot(w, x_ref[n], preferred_element_type=jnp.float32)  # (Cout, HW) f32
        o_ref[n] = y_n  # stash un-normalized result (f32 output buffer)
        s = s + jnp.sum(y_n, axis=1, keepdims=True)           # (Cout, 1)
        ss = ss + jnp.sum(y_n * y_n, axis=1, keepdims=True)   # (Cout, 1)

    cnt = float(n_batch * hw)
    mean = s / cnt
    var = ss / cnt - mean * mean          # biased variance (BatchNorm2d forward)
    inv = lax.rsqrt(var + EPS)
    scale = gamma_ref[...] * inv          # (Cout, 1)
    shift = beta_ref[...] - mean * scale  # (Cout, 1)

    # Pass 2: single fused scale/shift per element.
    for n in range(n_batch):
        o_ref[n] = o_ref[n] * scale + shift


def conv1x1_bn(x_nchw, conv_weight, gamma, beta):
    """x_nchw: (N, Cin, H, W) f32; conv_weight: (Cout, Cin, 1, 1); gamma/beta: (Cout,)."""
    N, Cin, H, W = x_nchw.shape
    Cout = conv_weight.shape[0]
    HW = H * W

    # Free reshapes (NCHW is contiguous); bf16 casts per perf review
    # (matmul still accumulates in f32; BN statistics stay f32).
    x3 = x_nchw.reshape(N, Cin, HW).astype(jnp.bfloat16)
    w2 = conv_weight[:, :, 0, 0].astype(jnp.bfloat16)        # (Cout, Cin)
    g2 = gamma.reshape(Cout, 1).astype(jnp.float32)
    b2 = beta.reshape(Cout, 1).astype(jnp.float32)

    y3 = pl.pallas_call(
        conv1x1_bn_kernel,
        out_shape=jax.ShapeDtypeStruct((N, Cout, HW), jnp.float32),
        in_specs=[
            pl.BlockSpec(memory_space=pltpu.MemorySpace.VMEM),
            pl.BlockSpec(memory_space=pltpu.MemorySpace.VMEM),
            pl.BlockSpec(memory_space=pltpu.MemorySpace.VMEM),
            pl.BlockSpec(memory_space=pltpu.MemorySpace.VMEM),
        ],
        out_specs=pl.BlockSpec(memory_space=pltpu.MemorySpace.VMEM),
    )(x3, w2, g2, b2)

    # Free reshape back to NCHW.
    return y3.reshape(N, Cout, H, W)


conv1x1_bn_jit = jax.jit(conv1x1_bn)


if __name__ == "__main__":
    key = jax.random.PRNGKey(0)
    k_x, k_w, k_g, k_b = jax.random.split(key, 4)

    # Shapes implied by the module: Conv2d(320, 320, 1x1) on (1, 320, 14, 14).
    N, C, Hh, Ww = 1, 320, 14, 14

    x = jax.random.normal(k_x, (N, C, Hh, Ww), dtype=jnp.float32)

    # Kaiming-uniform-like conv weight; non-trivial gamma/beta to exercise affine.
    fan_in = C * 1 * 1
    bound = (1.0 / fan_in) ** 0.5
    conv_w = jax.random.uniform(
        k_w, (C, C, 1, 1), dtype=jnp.float32, minval=-bound, maxval=bound
    )
    gamma = 1.0 + 0.1 * jax.random.normal(k_g, (C,), dtype=jnp.float32)
    beta = 0.1 * jax.random.normal(k_b, (C,), dtype=jnp.float32)

    out = conv1x1_bn_jit(x, conv_w, gamma, beta)
    jax.block_until_ready(out)

    # Plain-JAX f32 reference (tolerance loosened for bf16 conv inputs).
    x_mat = jnp.transpose(x, (0, 2, 3, 1)).reshape(-1, C)
    y_ref = x_mat @ conv_w[:, :, 0, 0].T
    mu = y_ref.mean(axis=0)
    va = ((y_ref - mu) ** 2).mean(axis=0)
    y_ref = (y_ref - mu) / jnp.sqrt(va + EPS) * gamma + beta
    y_ref = jnp.transpose(y_ref.reshape(N, Hh, Ww, C), (0, 3, 1, 2))
    assert out.shape == (N, C, Hh, Ww)
    assert jnp.allclose(out, y_ref, atol=5e-2, rtol=5e-2)

    print("KERNEL_OK")
</pallas_src>

<mosaic_0001>
module attributes {stable_mosaic.version = 11 : i64} {
  func.func @conv1x1_bn_kernel(%arg0: memref<1x320x196xbf16, #tpu.memory_space<vmem>>, %arg1: memref<320x320xbf16, #tpu.memory_space<vmem>>, %arg2: memref<320x1xf32, #tpu.memory_space<vmem>>, %arg3: memref<320x1xf32, #tpu.memory_space<vmem>>, %arg4: memref<1x320x196xf32, #tpu.memory_space<vmem>>) attributes {dimension_semantics = [], scalar_prefetch = 0 : i64, scratch_operands = 0 : i64, tpu.core_type = #tpu.core_type<tc>} {
    %c0 = arith.constant 0 : index
    %c0_0 = arith.constant 0 : index
    %0 = vector.load %arg1[%c0, %c0_0] : memref<320x320xbf16, #tpu.memory_space<vmem>>, vector<320x320xbf16>
    %cst = arith.constant 0.000000e+00 : f32
    %1 = vector.broadcast %cst : f32 to vector<320x1xf32>
    %cst_1 = arith.constant 0.000000e+00 : f32
    %2 = vector.broadcast %cst_1 : f32 to vector<320x1xf32>
    %c0_2 = arith.constant 0 : index
    %c0_3 = arith.constant 0 : index
    %c0_4 = arith.constant 0 : index
    %3 = vector.load %arg0[%c0_2, %c0_3, %c0_4] : memref<1x320x196xbf16, #tpu.memory_space<vmem>>, vector<1x320x196xbf16>
    %4 = vector.shape_cast %3 : vector<1x320x196xbf16> to vector<320x196xbf16>
    %cst_5 = arith.constant dense<0.000000e+00> : vector<320x196xf32>
    %5 = tpu.matmul %0, %4, %cst_5 {dimension_numbers = #tpu.dot_dimension_numbers<[1], [0], [0], [1], [0, 0, 1, 1], [], []>} : vector<320x320xbf16>, vector<320x196xbf16>, vector<320x196xf32> -> vector<320x196xf32>
    %c0_6 = arith.constant 0 : index
    %c0_7 = arith.constant 0 : index
    %c0_8 = arith.constant 0 : index
    %6 = vector.load %arg4[%c0_6, %c0_7, %c0_8] : memref<1x320x196xf32, #tpu.memory_space<vmem>>, vector<1x320x196xf32>
    %7 = vector.shape_cast %6 : vector<1x320x196xf32> to vector<320x196xf32>
    %8 = vector.shape_cast %5 : vector<320x196xf32> to vector<1x320x196xf32>
    tpu.vector_store %arg4[%c0_6, %c0_7, %c0_8], %8 {strides = array<i32>} : memref<1x320x196xf32, #tpu.memory_space<vmem>>, vector<1x320x196xf32>,
    %cst_9 = arith.constant dense<0.000000e+00> : vector<320xf32>
    %9 = vector.multi_reduction <add>, %5, %cst_9 [1] : vector<320x196xf32> to vector<320xf32>
    %10 = vector.shape_cast %9 : vector<320xf32> to vector<320x1xf32>
    %11 = arith.addf %1, %10 : vector<320x1xf32>
    %12 = arith.mulf %5, %5 : vector<320x196xf32>
    %cst_10 = arith.constant dense<0.000000e+00> : vector<320xf32>
    %13 = vector.multi_reduction <add>, %12, %cst_10 [1] : vector<320x196xf32> to vector<320xf32>
    %14 = vector.shape_cast %13 : vector<320xf32> to vector<320x1xf32>
    %15 = arith.addf %2, %14 : vector<320x1xf32>
    %cst_11 = arith.constant 1.960000e+02 : f32
    %16 = vector.broadcast %cst_11 : f32 to vector<320x1xf32>
    %17 = arith.divf %11, %16 : vector<320x1xf32>
    %cst_12 = arith.constant 1.960000e+02 : f32
    %18 = vector.broadcast %cst_12 : f32 to vector<320x1xf32>
    %19 = arith.divf %15, %18 : vector<320x1xf32>
    %20 = arith.mulf %17, %17 : vector<320x1xf32>
    %21 = arith.subf %19, %20 : vector<320x1xf32>
    %cst_13 = arith.constant 9.99999974E-6 : f32
    %22 = vector.broadcast %cst_13 : f32 to vector<320x1xf32>
    %23 = arith.addf %21, %22 : vector<320x1xf32>
    %24 = math.rsqrt %23 : vector<320x1xf32>
    %c0_14 = arith.constant 0 : index
    %c0_15 = arith.constant 0 : index
    %25 = vector.load %arg2[%c0_14, %c0_15] : memref<320x1xf32, #tpu.memory_space<vmem>>, vector<320x1xf32>
    %26 = arith.mulf %25, %24 : vector<320x1xf32>
    %c0_16 = arith.constant 0 : index
    %c0_17 = arith.constant 0 : index
    %27 = vector.load %arg3[%c0_16, %c0_17] : memref<320x1xf32, #tpu.memory_space<vmem>>, vector<320x1xf32>
    %28 = arith.mulf %17, %26 : vector<320x1xf32>
    %29 = arith.subf %27, %28 : vector<320x1xf32>
    %c0_18 = arith.constant 0 : index
    %c0_19 = arith.constant 0 : index
    %c0_20 = arith.constant 0 : index
    %30 = vector.load %arg4[%c0_18, %c0_19, %c0_20] : memref<1x320x196xf32, #tpu.memory_space<vmem>>, vector<1x320x196xf32>
    %31 = vector.shape_cast %30 : vector<1x320x196xf32> to vector<320x196xf32>
    %32 = vector.broadcast %26 : vector<320x1xf32> to vector<320x196xf32>
    %33 = arith.mulf %31, %32 : vector<320x196xf32>
    %34 = vector.broadcast %29 : vector<320x1xf32> to vector<320x196xf32>
    %35 = arith.addf %33, %34 : vector<320x196xf32>
    %c0_21 = arith.constant 0 : index
    %c0_22 = arith.constant 0 : index
    %c0_23 = arith.constant 0 : index
    %36 = vector.load %arg4[%c0_21, %c0_22, %c0_23] : memref<1x320x196xf32, #tpu.memory_space<vmem>>, vector<1x320x196xf32>
    %37 = vector.shape_cast %36 : vector<1x320x196xf32> to vector<320x196xf32>
    %38 = vector.shape_cast %35 : vector<320x196xf32> to vector<1x320x196xf32>
    tpu.vector_store %arg4[%c0_21, %c0_22, %c0_23], %38 {strides = array<i32>} : memref<1x320x196xf32, #tpu.memory_space<vmem>>, vector<1x320x196xf32>,
    return
  }
}

</mosaic_0001>

<llo_original>
// kernel: conv1x1_bn.1
$region0: #{conv1x1_bn.1}
  #allocation0 [shape = 'u32[]', space=smem, size = 0x4, offset = 0x4, fixed_abs, tag = 'smem constant byte address 0x4 - core index']
  #allocation1 [shape = 'u32[144,128]{1,0:T(1,128)}', space=vmem, size = 0x12000, scoped, tag = 'internal scratch']
  %s0 = inlined_call_operand.vmem [shape: bf16[1,320,196], index: 0, kind: input, shape index: {}]
  %s1 = inlined_call_operand.vmem [shape: bf16[320,320], index: 1, kind: input, shape index: {}]
  %s2 = inlined_call_operand.vmem [shape: f32[320,1], index: 2, kind: input, shape index: {}]
  %s3 = inlined_call_operand.vmem [shape: f32[320,1], index: 3, kind: input, shape index: {}]
  %s4 = inlined_call_operand.vmem [shape: f32[1,320,196], index: 4, kind: output, shape index: {}]
  %s5 = sld [smem:[#allocation0]]
  $region26: #{conv1x1_bn.1} parent=0
    _
  %s7 = ssub.s32 1, %s5
  %s8 = scalar_select 0, %s7, %s5
  // Predicated region
  $region2: #{conv1x1_bn.1} parent=0 // pred_check
    _
  $region3: #{conv1x1_bn.1} parent=0 // pred_check_branch
    %10 = sbr.rel (0) target = $region5
  $region4: #{conv1x1_bn.1} parent=0 // pred_region
    _
  $region5: #{conv1x1_bn.1} parent=0 // pred_fallthru
    _
  // Predicated region
  $region6: #{conv1x1_bn.1} parent=0 // pred_check
    _
  $region7: #{conv1x1_bn.1} parent=0 // pred_check_branch
    %12 = sbr.rel (0) target = $region9
  $region8: #{conv1x1_bn.1} parent=0 // pred_region
    _
  $region9: #{conv1x1_bn.1} parent=0 // pred_fallthru
    _
  // Predicated region
  $region10: #{conv1x1_bn.1} parent=0 // pred_check
    _
  $region11: #{conv1x1_bn.1} parent=0 // pred_check_branch
    %14 = sbr.rel (0) target = $region13
  $region12: #{conv1x1_bn.1} parent=0 // pred_region
    _
  $region13: #{conv1x1_bn.1} parent=0 // pred_fallthru
    _
  // Predicated region
  $region14: #{conv1x1_bn.1} parent=0 // pred_check
    _
  $region15: #{conv1x1_bn.1} parent=0 // pred_check_branch
    %16 = sbr.rel (0) target = $region17
  $region16: #{conv1x1_bn.1} parent=0 // pred_region
    _
  $region17: #{conv1x1_bn.1} parent=0 // pred_fallthru
    _
  %v18 = vld [vmem:[%s1] sm:$0xff]
  %v19 = vld [vmem:[%s1 + $0x8] sm:$0xf]
  %v20 = vld [vmem:[%s1 + $0xc] sm:$0xff]
  %v21 = vld [vmem:[%s1 + $0x14] sm:$0xf]
  %v22 = vld [vmem:[%s1 + $0x18] sm:$0xff]
  %v23 = vld [vmem:[%s1 + $0x20] sm:$0xf]
  %v24 = vld [vmem:[%s1 + $0x24] sm:$0xff]
  %v25 = vld [vmem:[%s1 + $0x2c] sm:$0xf]
  %v26 = vld [vmem:[%s1 + $0x30] sm:$0xff]
  %v27 = vld [vmem:[%s1 + $0x38] sm:$0xf]
  %v28 = vld [vmem:[%s1 + $0x3c] sm:$0xff]
  %v29 = vld [vmem:[%s1 + $0x44] sm:$0xf]
  %v30 = vld [vmem:[%s1 + $0x48] sm:$0xff]
  %v31 = vld [vmem:[%s1 + $0x50] sm:$0xf]
  %v32 = vld [vmem:[%s1 + $0x54] sm:$0xff]
  %v33 = vld [vmem:[%s1 + $0x5c] sm:$0xf]
  %v34 = vld [vmem:[%s1 + $0x60] sm:$0xff]
  %v35 = vld [vmem:[%s1 + $0x68] sm:$0xf]
  %v36 = vld [vmem:[%s1 + $0x6c] sm:$0xff]
  %v37 = vld [vmem:[%s1 + $0x74] sm:$0xf]
  %v38 = vld [vmem:[%s1 + $0x78] sm:$0xff]
  %v39 = vld [vmem:[%s1 + $0x80] sm:$0xf]
  %v40 = vld [vmem:[%s1 + $0x84] sm:$0xff]
  %v41 = vld [vmem:[%s1 + $0x8c] sm:$0xf]
  %v42 = vld [vmem:[%s1 + $0x90] sm:$0xff]
  %v43 = vld [vmem:[%s1 + $0x98] sm:$0xf]
  %v44 = vld [vmem:[%s1 + $0x9c] sm:$0xff]
  %v45 = vld [vmem:[%s1 + $0xa4] sm:$0xf]
  %v46 = vld [vmem:[%s1 + $0xa8] sm:$0xff]
  %v47 = vld [vmem:[%s1 + $0xb0] sm:$0xf]
  %v48 = vld [vmem:[%s1 + $0xb4] sm:$0xff]
  %v49 = vld [vmem:[%s1 + $0xbc] sm:$0xf]
  %v50 = vld [vmem:[%s1 + $0xc0] sm:$0xff]
  %v51 = vld [vmem:[%s1 + $0xc8] sm:$0xf]
  %v52 = vld [vmem:[%s1 + $0xcc] sm:$0xff]
  %v53 = vld [vmem:[%s1 + $0xd4] sm:$0xf]
  %v54 = vld [vmem:[%s1 + $0xd8] sm:$0xff]
  %v55 = vld [vmem:[%s1 + $0xe0] sm:$0xf]
  %v56 = vld [vmem:[%s1 + $0xe4] sm:$0xff]
  %v57 = vld [vmem:[%s1 + $0xec] sm:$0xf]
  %v58 = vld [vmem:[%s1 + $0xf0] sm:$0xff]
  %v59 = vld [vmem:[%s1 + $0xf8] sm:$0xf]
  %v60 = vld [vmem:[%s1 + $0xfc] sm:$0xff]
  %v61 = vld [vmem:[%s1 + $0x104] sm:$0xf]
  %v62 = vld [vmem:[%s1 + $0x108] sm:$0xff]
  %v63 = vld [vmem:[%s1 + $0x110] sm:$0xf]
  %v64 = vld [vmem:[%s1 + $0x114] sm:$0xff]
  %v65 = vld [vmem:[%s1 + $0x11c] sm:$0xf]
  %v66 = vld [vmem:[%s1 + $0x120] sm:$0xff]
  %v67 = vld [vmem:[%s1 + $0x128] sm:$0xf]
  %v68 = vld [vmem:[%s1 + $0x12c] sm:$0xff]
  %v69 = vld [vmem:[%s1 + $0x134] sm:$0xf]
  %v70 = vld [vmem:[%s1 + $0x138] sm:$0xff]
  %v71 = vld [vmem:[%s1 + $0x140] sm:$0xf]
  %v72 = vld [vmem:[%s1 + $0x144] sm:$0xff]
  %v73 = vld [vmem:[%s1 + $0x14c] sm:$0xf]
  %v74 = vld [vmem:[%s1 + $0x150] sm:$0xff]
  %v75 = vld [vmem:[%s1 + $0x158] sm:$0xf]
  %v76 = vld [vmem:[%s1 + $0x15c] sm:$0xff]
  %v77 = vld [vmem:[%s1 + $0x164] sm:$0xf]
  %v78 = vld [vmem:[%s1 + $0x168] sm:$0xff]
  %v79 = vld [vmem:[%s1 + $0x170] sm:$0xf]
  %v80 = vld [vmem:[%s1 + $0x174] sm:$0xff]
  %v81 = vld [vmem:[%s1 + $0x17c] sm:$0xf]
  %v82 = vld [vmem:[%s1 + $0x180] sm:$0xff]
  %v83 = vld [vmem:[%s1 + $0x188] sm:$0xf]
  %v84 = vld [vmem:[%s1 + $0x18c] sm:$0xff]
  %v85 = vld [vmem:[%s1 + $0x194] sm:$0xf]
  %v86 = vld [vmem:[%s1 + $0x198] sm:$0xff]
  %v87 = vld [vmem:[%s1 + $0x1a0] sm:$0xf]
  %v88 = vld [vmem:[%s1 + $0x1a4] sm:$0xff]
  %v89 = vld [vmem:[%s1 + $0x1ac] sm:$0xf]
  %v90 = vld [vmem:[%s1 + $0x1b0] sm:$0xff]
  %v91 = vld [vmem:[%s1 + $0x1b8] sm:$0xf]
  %v92 = vld [vmem:[%s1 + $0x1bc] sm:$0xff]
  %v93 = vld [vmem:[%s1 + $0x1c4] sm:$0xf]
  %v94 = vld [vmem:[%s1 + $0x1c8] sm:$0xff]
  %v95 = vld [vmem:[%s1 + $0x1d0] sm:$0xf]
  %v96 = vld [vmem:[%s1 + $0x1d4] sm:$0xff]
  %v97 = vld [vmem:[%s1 + $0x1dc] sm:$0xf]
  %v98 = vld [vmem:[%s0] sm:$0xff]
  %v99 = vld [vmem:[%s0 + $0x8] sm:$0xff]
  %v100 = vld [vmem:[%s0 + $0x10] sm:$0xff]
  %v101 = vld [vmem:[%s0 + $0x18] sm:$0xff]
  %v102 = vld [vmem:[%s0 + $0x20] sm:$0xff]
  %v103 = vld [vmem:[%s0 + $0x28] sm:$0xff]
  %v104 = vld [vmem:[%s0 + $0x30] sm:$0xff]
  %v105 = vld [vmem:[%s0 + $0x38] sm:$0xff]
  %v106 = vld [vmem:[%s0 + $0x40] sm:$0xff]
  %v107 = vld [vmem:[%s0 + $0x48] sm:$0xff]
  %v108 = vld [vmem:[%s0 + $0x50] sm:$0xff]
  %v109 = vld [vmem:[%s0 + $0x58] sm:$0xff]
  %v110 = vld [vmem:[%s0 + $0x60] sm:$0xff]
  %v111 = vld [vmem:[%s0 + $0x68] sm:$0xff]
  %v112 = vld [vmem:[%s0 + $0x70] sm:$0xff]
  %v113 = vld [vmem:[%s0 + $0x78] sm:$0xff]
  %v114 = vld [vmem:[%s0 + $0x80] sm:$0xff]
  %v115 = vld [vmem:[%s0 + $0x88] sm:$0xff]
  %v116 = vld [vmem:[%s0 + $0x90] sm:$0xff]
  %v117 = vld [vmem:[%s0 + $0x98] sm:$0xff]
  %v118 = vld [vmem:[%s0 + $0xa0] sm:$0xff]
  %v119 = vld [vmem:[%s0 + $0xa8] sm:$0xff]
  %v120 = vld [vmem:[%s0 + $0xb0] sm:$0xff]
  %v121 = vld [vmem:[%s0 + $0xb8] sm:$0xff]
  %v122 = vld [vmem:[%s0 + $0xc0] sm:$0xff]
  %v123 = vld [vmem:[%s0 + $0xc8] sm:$0xff]
  %v124 = vld [vmem:[%s0 + $0xd0] sm:$0xff]
  %v125 = vld [vmem:[%s0 + $0xd8] sm:$0xff]
  %v126 = vld [vmem:[%s0 + $0xe0] sm:$0xff]
  %v127 = vld [vmem:[%s0 + $0xe8] sm:$0xff]
  %v128 = vld [vmem:[%s0 + $0xf0] sm:$0xff]
  %v129 = vld [vmem:[%s0 + $0xf8] sm:$0xff]
  %v130 = vld [vmem:[%s0 + $0x100] sm:$0xff]
  %v131 = vld [vmem:[%s0 + $0x108] sm:$0xff]
  %v132 = vld [vmem:[%s0 + $0x110] sm:$0xff]
  %v133 = vld [vmem:[%s0 + $0x118] sm:$0xff]
  %v134 = vld [vmem:[%s0 + $0x120] sm:$0xff]
  %v135 = vld [vmem:[%s0 + $0x128] sm:$0xff]
  %v136 = vld [vmem:[%s0 + $0x130] sm:$0xff]
  %v137 = vld [vmem:[%s0 + $0x138] sm:$0xff]
  %v218 = vunpack.c.l.b16 %v18
  %v219 = vunpack.c.h.b16 %v18
  %v220 = vunpack.c.l.b16 %v19
  %v221 = vunpack.c.l.b16 %v20
  %v222 = vunpack.c.h.b16 %v20
  %v223 = vunpack.c.l.b16 %v21
  %v224 = vunpack.c.l.b16 %v22
  %v225 = vunpack.c.h.b16 %v22
  %v226 = vunpack.c.l.b16 %v23
  %v227 = vunpack.c.l.b16 %v24
  %v228 = vunpack.c.h.b16 %v24
  %v229 = vunpack.c.l.b16 %v25
  %v230 = vunpack.c.l.b16 %v26
  %v231 = vunpack.c.h.b16 %v26
  %v232 = vunpack.c.l.b16 %v27
  %v233 = vunpack.c.l.b16 %v28
  %v234 = vunpack.c.h.b16 %v28
  %v235 = vunpack.c.l.b16 %v29
  %v236 = vunpack.c.l.b16 %v30
  %v237 = vunpack.c.h.b16 %v30
  %v238 = vunpack.c.l.b16 %v31
  %v239 = vunpack.c.l.b16 %v32
  %v240 = vunpack.c.h.b16 %v32
  %v241 = vunpack.c.l.b16 %v33
  %v242 = vunpack.c.l.b16 %v34
  %v243 = vunpack.c.h.b16 %v34
  %v244 = vunpack.c.l.b16 %v35
  %v245 = vunpack.c.l.b16 %v36
  %v246 = vunpack.c.h.b16 %v36
  %v247 = vunpack.c.l.b16 %v37
  %v248 = vunpack.c.l.b16 %v38
  %v249 = vunpack.c.h.b16 %v38
  %v250 = vunpack.c.l.b16 %v39
  %v251 = vunpack.c.l.b16 %v40
  %v252 = vunpack.c.h.b16 %v40
  %v253 = vunpack.c.l.b16 %v41
  %v254 = vunpack.c.l.b16 %v42
  %v255 = vunpack.c.h.b16 %v42
  %v256 = vunpack.c.l.b16 %v43
  %v257 = vunpack.c.l.b16 %v44
  %v258 = vunpack.c.h.b16 %v44
  %v259 = vunpack.c.l.b16 %v45
  %v260 = vunpack.c.l.b16 %v46
  %v261 = vunpack.c.h.b16 %v46
  %v262 = vunpack.c.l.b16 %v47
  %v263 = vunpack.c.l.b16 %v48
  %v264 = vunpack.c.h.b16 %v48
  %v265 = vunpack.c.l.b16 %v49
  %v266 = vunpack.c.l.b16 %v50
  %v267 = vunpack.c.h.b16 %v50
  %v268 = vunpack.c.l.b16 %v51
  %v269 = vunpack.c.l.b16 %v52
  %v270 = vunpack.c.h.b16 %v52
  %v271 = vunpack.c.l.b16 %v53
  %v272 = vunpack.c.l.b16 %v54
  %v273 = vunpack.c.h.b16 %v54
  %v274 = vunpack.c.l.b16 %v55
  %v275 = vunpack.c.l.b16 %v56
  %v276 = vunpack.c.h.b16 %v56
  %v277 = vunpack.c.l.b16 %v57
  %v278 = vunpack.c.l.b16 %v58
  %v279 = vunpack.c.h.b16 %v58
  %v280 = vunpack.c.l.b16 %v59
  %v281 = vunpack.c.l.b16 %v60
  %v282 = vunpack.c.h.b16 %v60
  %v283 = vunpack.c.l.b16 %v61
  %v284 = vunpack.c.l.b16 %v62
  %v285 = vunpack.c.h.b16 %v62
  %v286 = vunpack.c.l.b16 %v63
  %v287 = vunpack.c.l.b16 %v64
  %v288 = vunpack.c.h.b16 %v64
  %v289 = vunpack.c.l.b16 %v65
  %v290 = vunpack.c.l.b16 %v66
  %v291 = vunpack.c.h.b16 %v66
  %v292 = vunpack.c.l.b16 %v67
  %v293 = vunpack.c.l.b16 %v68
  %v294 = vunpack.c.h.b16 %v68
  %v295 = vunpack.c.l.b16 %v69
  %v296 = vunpack.c.l.b16 %v70
  %v297 = vunpack.c.h.b16 %v70
  %v298 = vunpack.c.l.b16 %v71
  %v299 = vunpack.c.l.b16 %v72
  %v300 = vunpack.c.h.b16 %v72
  %v301 = vunpack.c.l.b16 %v73
  %v302 = vunpack.c.l.b16 %v74
  %v303 = vunpack.c.h.b16 %v74
  %v304 = vunpack.c.l.b16 %v75
  %v305 = vunpack.c.l.b16 %v76
  %v306 = vunpack.c.h.b16 %v76
  %v307 = vunpack.c.l.b16 %v77
  %v308 = vunpack.c.l.b16 %v78
  %v309 = vunpack.c.h.b16 %v78
  %v310 = vunpack.c.l.b16 %v79
  %v311 = vunpack.c.l.b16 %v80
  %v312 = vunpack.c.h.b16 %v80
  %v313 = vunpack.c.l.b16 %v81
  %v314 = vunpack.c.l.b16 %v82
  %v315 = vunpack.c.h.b16 %v82
  %v316 = vunpack.c.l.b16 %v83
  %v317 = vunpack.c.l.b16 %v84
  %v318 = vunpack.c.h.b16 %v84
  %v319 = vunpack.c.l.b16 %v85
  %v320 = vunpack.c.l.b16 %v86
  %v321 = vunpack.c.h.b16 %v86
  %v322 = vunpack.c.l.b16 %v87
  %v323 = vunpack.c.l.b16 %v88
  %v324 = vunpack.c.h.b16 %v88
  %v325 = vunpack.c.l.b16 %v89
  %v326 = vunpack.c.l.b16 %v90
  %v327 = vunpack.c.h.b16 %v90
  %v328 = vunpack.c.l.b16 %v91
  %v329 = vunpack.c.l.b16 %v92
  %v330 = vunpack.c.h.b16 %v92
  %v331 = vunpack.c.l.b16 %v93
  %v332 = vunpack.c.l.b16 %v94
  %v333 = vunpack.c.h.b16 %v94
  %v334 = vunpack.c.l.b16 %v95
  %v335 = vunpack.c.l.b16 %v96
  %v336 = vunpack.c.h.b16 %v96
  %v337 = vunpack.c.l.b16 %v97
  %v338 = vpack.c.b16 %v221, %v218
  %v339 = vpack.c.b16 %v222, %v219
  %v340 = vpack.c.b16 %v223, %v220
  %v341 = vpack.c.b16 %v227, %v224
  %v342 = vpack.c.b16 %v228, %v225
  %v343 = vpack.c.b16 %v229, %v226
  %v344 = vpack.c.b16 %v233, %v230
  %v345 = vpack.c.b16 %v234, %v231
  %v346 = vpack.c.b16 %v235, %v232
  %v347 = vpack.c.b16 %v239, %v236
  %v348 = vpack.c.b16 %v240, %v237
  %v349 = vpack.c.b16 %v241, %v238
  %v350 = vpack.c.b16 %v245, %v242
  %v351 = vpack.c.b16 %v246, %v243
  %v352 = vpack.c.b16 %v247, %v244
  %v353 = vpack.c.b16 %v251, %v248
  %v354 = vpack.c.b16 %v252, %v249
  %v355 = vpack.c.b16 %v253, %v250
  %v356 = vpack.c.b16 %v257, %v254
  %v357 = vpack.c.b16 %v258, %v255
  %v358 = vpack.c.b16 %v259, %v256
  %v359 = vpack.c.b16 %v263, %v260
  %v360 = vpack.c.b16 %v264, %v261
  %v361 = vpack.c.b16 %v265, %v262
  %v362 = vpack.c.b16 %v269, %v266
  %v363 = vpack.c.b16 %v270, %v267
  %v364 = vpack.c.b16 %v271, %v268
  %v365 = vpack.c.b16 %v275, %v272
  %v366 = vpack.c.b16 %v276, %v273
  %v367 = vpack.c.b16 %v277, %v274
  %v368 = vpack.c.b16 %v281, %v278
  %v369 = vpack.c.b16 %v282, %v279
  %v370 = vpack.c.b16 %v283, %v280
  %v371 = vpack.c.b16 %v287, %v284
  %v372 = vpack.c.b16 %v288, %v285
  %v373 = vpack.c.b16 %v289, %v286
  %v374 = vpack.c.b16 %v293, %v290
  %v375 = vpack.c.b16 %v294, %v291
  %v376 = vpack.c.b16 %v295, %v292
  %v377 = vpack.c.b16 %v299, %v296
  %v378 = vpack.c.b16 %v300, %v297
  %v379 = vpack.c.b16 %v301, %v298
  %v380 = vpack.c.b16 %v305, %v302
  %v381 = vpack.c.b16 %v306, %v303
  %v382 = vpack.c.b16 %v307, %v304
  %v383 = vpack.c.b16 %v311, %v308
  %v384 = vpack.c.b16 %v312, %v309
  %v385 = vpack.c.b16 %v313, %v310
  %v386 = vpack.c.b16 %v317, %v314
  %v387 = vpack.c.b16 %v318, %v315
  %v388 = vpack.c.b16 %v319, %v316
  %v389 = vpack.c.b16 %v323, %v320
  %v390 = vpack.c.b16 %v324, %v321
  %v391 = vpack.c.b16 %v325, %v322
  %v392 = vpack.c.b16 %v329, %v326
  %v393 = vpack.c.b16 %v330, %v327
  %v394 = vpack.c.b16 %v331, %v328
  %v395 = vpack.c.b16 %v335, %v332
  %v396 = vpack.c.b16 %v336, %v333
  %v397 = vpack.c.b16 %v337, %v334
  %v478 = vunpack.c.l.b16 %v98
  %v479 = vunpack.c.h.b16 %v98
  %v480 = vunpack.c.l.b16 %v99
  %v481 = vunpack.c.h.b16 %v99
  %v482 = vunpack.c.l.b16 %v100
  %v483 = vunpack.c.h.b16 %v100
  %v484 = vunpack.c.l.b16 %v101
  %v485 = vunpack.c.h.b16 %v101
  %v486 = vunpack.c.l.b16 %v102
  %v487 = vunpack.c.h.b16 %v102
  %v488 = vunpack.c.l.b16 %v103
  %v489 = vunpack.c.h.b16 %v103
  %v490 = vunpack.c.l.b16 %v104
  %v491 = vunpack.c.h.b16 %v104
  %v492 = vunpack.c.l.b16 %v105
  %v493 = vunpack.c.h.b16 %v105
  %v494 = vunpack.c.l.b16 %v106
  %v495 = vunpack.c.h.b16 %v106
  %v496 = vunpack.c.l.b16 %v107
  %v497 = vunpack.c.h.b16 %v107
  %v498 = vunpack.c.l.b16 %v108
  %v499 = vunpack.c.h.b16 %v108
  %v500 = vunpack.c.l.b16 %v109
  %v501 = vunpack.c.h.b16 %v109
  %v502 = vunpack.c.l.b16 %v110
  %v503 = vunpack.c.h.b16 %v110
  %v504 = vunpack.c.l.b16 %v111
  %v505 = vunpack.c.h.b16 %v111
  %v506 = vunpack.c.l.b16 %v112
  %v507 = vunpack.c.h.b16 %v112
  %v508 = vunpack.c.l.b16 %v113
  %v509 = vunpack.c.h.b16 %v113
  %v510 = vunpack.c.l.b16 %v114
  %v511 = vunpack.c.h.b16 %v114
  %v512 = vunpack.c.l.b16 %v115
  %v513 = vunpack.c.h.b16 %v115
  %v514 = vunpack.c.l.b16 %v116
  %v515 = vunpack.c.h.b16 %v116
  %v516 = vunpack.c.l.b16 %v117
  %v517 = vunpack.c.h.b16 %v117
  %v518 = vunpack.c.l.b16 %v118
  %v519 = vunpack.c.h.b16 %v118
  %v520 = vunpack.c.l.b16 %v119
  %v521 = vunpack.c.h.b16 %v119
  %v522 = vunpack.c.l.b16 %v120
  %v523 = vunpack.c.h.b16 %v120
  %v524 = vunpack.c.l.b16 %v121
  %v525 = vunpack.c.h.b16 %v121
  %v526 = vunpack.c.l.b16 %v122
  %v527 = vunpack.c.h.b16 %v122
  %v528 = vunpack.c.l.b16 %v123
  %v529 = vunpack.c.h.b16 %v123
  %v530 = vunpack.c.l.b16 %v124
  %v531 = vunpack.c.h.b16 %v124
  %v532 = vunpack.c.l.b16 %v125
  %v533 = vunpack.c.h.b16 %v125
  %v534 = vunpack.c.l.b16 %v126
  %v535 = vunpack.c.h.b16 %v126
  %v536 = vunpack.c.l.b16 %v127
  %v537 = vunpack.c.h.b16 %v127
  %v538 = vunpack.c.l.b16 %v128
  %v539 = vunpack.c.h.b16 %v128
  %v540 = vunpack.c.l.b16 %v129
  %v541 = vunpack.c.h.b16 %v129
  %v542 = vunpack.c.l.b16 %v130
  %v543 = vunpack.c.h.b16 %v130
  %v544 = vunpack.c.l.b16 %v131
  %v545 = vunpack.c.h.b16 %v131
  %v546 = vunpack.c.l.b16 %v132
  %v547 = vunpack.c.h.b16 %v132
  %v548 = vunpack.c.l.b16 %v133
  %v549 = vunpack.c.h.b16 %v133
  %v550 = vunpack.c.l.b16 %v134
  %v551 = vunpack.c.h.b16 %v134
  %v552 = vunpack.c.l.b16 %v135
  %v553 = vunpack.c.h.b16 %v135
  %v554 = vunpack.c.l.b16 %v136
  %v555 = vunpack.c.h.b16 %v136
  %v556 = vunpack.c.l.b16 %v137
  %v557 = vunpack.c.h.b16 %v137
  %v558 = vpack.c.b16 %v480, %v478
  %v559 = vpack.c.b16 %v481, %v479
  %v560 = vpack.c.b16 %v484, %v482
  %v561 = vpack.c.b16 %v485, %v483
  %v562 = vpack.c.b16 %v488, %v486
  %v563 = vpack.c.b16 %v489, %v487
  %v564 = vpack.c.b16 %v492, %v490
  %v565 = vpack.c.b16 %v493, %v491
  %v566 = vpack.c.b16 %v496, %v494
  %v567 = vpack.c.b16 %v497, %v495
  %v568 = vpack.c.b16 %v500, %v498
  %v569 = vpack.c.b16 %v501, %v499
  %v570 = vpack.c.b16 %v504, %v502
  %v571 = vpack.c.b16 %v505, %v503
  %v572 = vpack.c.b16 %v508, %v506
  %v573 = vpack.c.b16 %v509, %v507
  %v574 = vpack.c.b16 %v512, %v510
  %v575 = vpack.c.b16 %v513, %v511
  %v576 = vpack.c.b16 %v516, %v514
  %v577 = vpack.c.b16 %v517, %v515
  %v578 = vpack.c.b16 %v520, %v518
  %v579 = vpack.c.b16 %v521, %v519
  %v580 = vpack.c.b16 %v524, %v522
  %v581 = vpack.c.b16 %v525, %v523
  %v582 = vpack.c.b16 %v528, %v526
  %v583 = vpack.c.b16 %v529, %v527
  %v584 = vpack.c.b16 %v532, %v530
  %v585 = vpack.c.b16 %v533, %v531
  %v586 = vpack.c.b16 %v536, %v534
  %v587 = vpack.c.b16 %v537, %v535
  %v588 = vpack.c.b16 %v540, %v538
  %v589 = vpack.c.b16 %v541, %v539
  %v590 = vpack.c.b16 %v544, %v542
  %v591 = vpack.c.b16 %v545, %v543
  %v592 = vpack.c.b16 %v548, %v546
  %v593 = vpack.c.b16 %v549, %v547
  %v594 = vpack.c.b16 %v552, %v550
  %v595 = vpack.c.b16 %v553, %v551
  %v596 = vpack.c.b16 %v556, %v554
  %v597 = vpack.c.b16 %v557, %v555
  %vm638 = vcmask 523264
  %v640 = vsel %vm638, %v340, 0
  %v643 = vsel %vm638, %v343, 0
  %v646 = vsel %vm638, %v346, 0
  %v649 = vsel %vm638, %v349, 0
  %v652 = vsel %vm638, %v352, 0
  %v655 = vsel %vm638, %v355, 0
  %v658 = vsel %vm638, %v358, 0
  %v661 = vsel %vm638, %v361, 0
  %v664 = vsel %vm638, %v364, 0
  %v667 = vsel %vm638, %v367, 0
  %v670 = vsel %vm638, %v370, 0
  %v673 = vsel %vm638, %v373, 0
  %v676 = vsel %vm638, %v376, 0
  %v679 = vsel %vm638, %v379, 0
  %v682 = vsel %vm638, %v382, 0
  %v685 = vsel %vm638, %v385, 0
  %v688 = vsel %vm638, %v388, 0
  %v691 = vsel %vm638, %v391, 0
  %v694 = vsel %vm638, %v394, 0
  %v697 = vsel %vm638, %v397, 0
  %699 = vmatprep.subr.bf16.mxu0 %v573
  %700 = vmatpush1.bf16.msra.mxu0 %v572
  %701 = vmatprep.subr.bf16.mxu0 %v571
  %702 = vmatpush1.bf16.msra.mxu0 %v570
  %703 = vmatprep.subr.bf16.mxu0 %v569
  %704 = vmatpush1.bf16.msra.mxu0 %v568
  %705 = vmatprep.subr.bf16.mxu0 %v567
  %706 = vmatpush1.bf16.msra.mxu0 %v566
  %707 = vmatprep.subr.bf16.mxu0 %v565
  %708 = vmatpush1.bf16.msra.mxu0 %v564
  %709 = vmatprep.subr.bf16.mxu0 %v563
  %710 = vmatpush1.bf16.msra.mxu0 %v562
  %711 = vmatprep.subr.bf16.mxu0 %v561
  %712 = vmatpush1.bf16.msra.mxu0 %v560
  %713 = vmatprep.subr.bf16.mxu0 %v559
  %714 = vmatpush1.bf16.msra.mxu0 %v558
  %715 = vmatprep.subr.bf16.mxu0 %v589
  %716 = vmatpush2.bf16.msra.mxu0 %v588
  %717 = vmatprep.subr.bf16.mxu0 %v587
  %718 = vmatpush2.bf16.msra.mxu0 %v586
  %719 = vmatprep.subr.bf16.mxu0 %v585
  %720 = vmatpush2.bf16.msra.mxu0 %v584
  %721 = vmatprep.subr.bf16.mxu0 %v583
  %722 = vmatpush2.bf16.msra.mxu0 %v582
  %723 = vmatprep.subr.bf16.mxu0 %v581
  %724 = vmatpush2.bf16.msra.mxu0 %v580
  %725 = vmatprep.subr.bf16.mxu0 %v579
  %726 = vmatpush2.bf16.msra.mxu0 %v578
  %727 = vmatprep.subr.bf16.mxu0 %v577
  %728 = vmatpush2.bf16.msra.mxu0 %v576
  %729 = vmatprep.subr.bf16.mxu0 %v575
  %730 = vmatpush2.bf16.msra.mxu0 %v574
  %731 = vmatprep.mubr.bf16.mxu0 %v339
  %732 = vmatmul.mubr.bf16.gmra.mxu0 %v338
  %v733 = vpop.f32.mrf.mxu0
  %v734 = vadd.f32 0.0, %v733
  %v735 = vpop.f32.mrf.mxu0
  %v736 = vadd.f32 0.0, %v735
  %v737 = vpop.f32.mrf.mxu0
  %v738 = vadd.f32 0.0, %v737
  %v739 = vpop.f32.mrf.mxu0
  %v740 = vadd.f32 0.0, %v739
  %741 = vmatprep.mubr.bf16.mxu0 %v342
  %742 = vmatmul.mubr.bf16.gmra.mxu0 %v341
  %v743 = vpop.f32.mrf.mxu0
  %v744 = vadd.f32 0.0, %v743
  %v745 = vpop.f32.mrf.mxu0
  %v746 = vadd.f32 0.0, %v745
  %v747 = vpop.f32.mrf.mxu0
  %v748 = vadd.f32 0.0, %v747
  %v749 = vpop.f32.mrf.mxu0
  %v750 = vadd.f32 0.0, %v749
  %751 = vmatprep.mubr.bf16.mxu0 %v345
  %752 = vmatmul.mubr.bf16.gmra.mxu0 %v344
  %v753 = vpop.f32.mrf.mxu0
  %v754 = vadd.f32 0.0, %v753
  %v755 = vpop.f32.mrf.mxu0
  %v756 = vadd.f32 0.0, %v755
  %v757 = vpop.f32.mrf.mxu0
  %v758 = vadd.f32 0.0, %v757
  %v759 = vpop.f32.mrf.mxu0
  %v760 = vadd.f32 0.0, %v759
  %761 = vmatprep.mubr.bf16.mxu0 %v348
  %762 = vmatmul.mubr.bf16.gmra.mxu0 %v347
  %v763 = vpop.f32.mrf.mxu0
  %v764 = vadd.f32 0.0, %v763
  %v765 = vpop.f32.mrf.mxu0
  %v766 = vadd.f32 0.0, %v765
  %v767 = vpop.f32.mrf.mxu0
  %v768 = vadd.f32 0.0, %v767
  %v769 = vpop.f32.mrf.mxu0
  %v770 = vadd.f32 0.0, %v769
  %771 = vmatprep.mubr.bf16.mxu0 %v351
  %772 = vmatmul.mubr.bf16.gmra.mxu0 %v350
  %v773 = vpop.f32.mrf.mxu0
  %v774 = vadd.f32 0.0, %v773
  %v775 = vpop.f32.mrf.mxu0
  %v776 = vadd.f32 0.0, %v775
  %v777 = vpop.f32.mrf.mxu0
  %v778 = vadd.f32 0.0, %v777
  %v779 = vpop.f32.mrf.mxu0
  %v780 = vadd.f32 0.0, %v779
  %781 = vmatprep.mubr.bf16.mxu0 %v354
  %782 = vmatmul.mubr.bf16.gmra.mxu0 %v353
  %v783 = vpop.f32.mrf.mxu0
  %v784 = vadd.f32 0.0, %v783
  %v785 = vpop.f32.mrf.mxu0
  %v786 = vadd.f32 0.0, %v785
  %v787 = vpop.f32.mrf.mxu0
  %v788 = vadd.f32 0.0, %v787
  %v789 = vpop.f32.mrf.mxu0
  %v790 = vadd.f32 0.0, %v789
  %791 = vmatprep.mubr.bf16.mxu0 %v357
  %792 = vmatmul.mubr.bf16.gmra.mxu0 %v356
  %v793 = vpop.f32.mrf.mxu0
  %v794 = vadd.f32 0.0, %v793
  %v795 = vpop.f32.mrf.mxu0
  %v796 = vadd.f32 0.0, %v795
  %v797 = vpop.f32.mrf.mxu0
  %v798 = vadd.f32 0.0, %v797
  %v799 = vpop.f32.mrf.mxu0
  %v800 = vadd.f32 0.0, %v799
  %801 = vmatprep.mubr.bf16.mxu0 %v360
  %802 = vmatmul.mubr.bf16.gmra.mxu0 %v359
  %v803 = vpop.f32.mrf.mxu0
  %v804 = vadd.f32 0.0, %v803
  %v805 = vpop.f32.mrf.mxu0
  %v806 = vadd.f32 0.0, %v805
  %v807 = vpop.f32.mrf.mxu0
  %v808 = vadd.f32 0.0, %v807
  %v809 = vpop.f32.mrf.mxu0
  %v810 = vadd.f32 0.0, %v809
  %811 = vmatprep.mubr.bf16.mxu0 %v363
  %812 = vmatmul.mubr.bf16.gmra.mxu0 %v362
  %v813 = vpop.f32.mrf.mxu0
  %v814 = vadd.f32 0.0, %v813
  %v815 = vpop.f32.mrf.mxu0
  %v816 = vadd.f32 0.0, %v815
  %v817 = vpop.f32.mrf.mxu0
  %v818 = vadd.f32 0.0, %v817
  %v819 = vpop.f32.mrf.mxu0
  %v820 = vadd.f32 0.0, %v819
  %821 = vmatprep.mubr.bf16.mxu0 %v366
  %822 = vmatmul.mubr.bf16.gmra.mxu0 %v365
  %v823 = vpop.f32.mrf.mxu0
  %v824 = vadd.f32 0.0, %v823
  %v825 = vpop.f32.mrf.mxu0
  %v826 = vadd.f32 0.0, %v825
  %v827 = vpop.f32.mrf.mxu0
  %v828 = vadd.f32 0.0, %v827
  %v829 = vpop.f32.mrf.mxu0
  %v830 = vadd.f32 0.0, %v829
  %831 = vmatprep.mubr.bf16.mxu0 %v369
  %832 = vmatmul.mubr.bf16.gmra.mxu0 %v368
  %v833 = vpop.f32.mrf.mxu0
  %v834 = vadd.f32 0.0, %v833
  %v835 = vpop.f32.mrf.mxu0
  %v836 = vadd.f32 0.0, %v835
  %v837 = vpop.f32.mrf.mxu0
  %v838 = vadd.f32 0.0, %v837
  %v839 = vpop.f32.mrf.mxu0
  %v840 = vadd.f32 0.0, %v839
  %841 = vmatprep.mubr.bf16.mxu0 %v372
  %842 = vmatmul.mubr.bf16.gmra.mxu0 %v371
  %v843 = vpop.f32.mrf.mxu0
  %v844 = vadd.f32 0.0, %v843
  %v845 = vpop.f32.mrf.mxu0
  %v846 = vadd.f32 0.0, %v845
  %v847 = vpop.f32.mrf.mxu0
  %v848 = vadd.f32 0.0, %v847
  %v849 = vpop.f32.mrf.mxu0
  %v850 = vadd.f32 0.0, %v849
  %851 = vmatprep.mubr.bf16.mxu0 %v375
  %852 = vmatmul.mubr.bf16.gmra.mxu0 %v374
  %v853 = vpop.f32.mrf.mxu0
  %v854 = vadd.f32 0.0, %v853
  %v855 = vpop.f32.mrf.mxu0
  %v856 = vadd.f32 0.0, %v855
  %v857 = vpop.f32.mrf.mxu0
  %v858 = vadd.f32 0.0, %v857
  %v859 = vpop.f32.mrf.mxu0
  %v860 = vadd.f32 0.0, %v859
  %861 = vmatprep.mubr.bf16.mxu0 %v378
  %862 = vmatmul.mubr.bf16.gmra.mxu0 %v377
  %v863 = vpop.f32.mrf.mxu0
  %v864 = vadd.f32 0.0, %v863
  %v865 = vpop.f32.mrf.mxu0
  %v866 = vadd.f32 0.0, %v865
  %v867 = vpop.f32.mrf.mxu0
  %v868 = vadd.f32 0.0, %v867
  %v869 = vpop.f32.mrf.mxu0
  %v870 = vadd.f32 0.0, %v869
  %871 = vmatprep.mubr.bf16.mxu0 %v381
  %872 = vmatmul.mubr.bf16.gmra.mxu0 %v380
  %v873 = vpop.f32.mrf.mxu0
  %v874 = vadd.f32 0.0, %v873
  %v875 = vpop.f32.mrf.mxu0
  %v876 = vadd.f32 0.0, %v875
  %v877 = vpop.f32.mrf.mxu0
  %v878 = vadd.f32 0.0, %v877
  %v879 = vpop.f32.mrf.mxu0
  %v880 = vadd.f32 0.0, %v879
  %881 = vmatprep.mubr.bf16.mxu0 %v384
  %882 = vmatmul.mubr.bf16.gmra.mxu0 %v383
  %v883 = vpop.f32.mrf.mxu0
  %v884 = vadd.f32 0.0, %v883
  %v885 = vpop.f32.mrf.mxu0
  %v886 = vadd.f32 0.0, %v885
  %v887 = vpop.f32.mrf.mxu0
  %v888 = vadd.f32 0.0, %v887
  %v889 = vpop.f32.mrf.mxu0
  %v890 = vadd.f32 0.0, %v889
  %891 = vmatprep.mubr.bf16.mxu0 %v387
  %892 = vmatmul.mubr.bf16.gmra.mxu0 %v386
  %v893 = vpop.f32.mrf.mxu0
  %v894 = vadd.f32 0.0, %v893
  %v895 = vpop.f32.mrf.mxu0
  %v896 = vadd.f32 0.0, %v895
  %v897 = vpop.f32.mrf.mxu0
  %v898 = vadd.f32 0.0, %v897
  %v899 = vpop.f32.mrf.mxu0
  %v900 = vadd.f32 0.0, %v899
  %901 = vmatprep.mubr.bf16.mxu0 %v390
  %902 = vmatmul.mubr.bf16.gmra.mxu0 %v389
  %v903 = vpop.f32.mrf.mxu0
  %v904 = vadd.f32 0.0, %v903
  %v905 = vpop.f32.mrf.mxu0
  %v906 = vadd.f32 0.0, %v905
  %v907 = vpop.f32.mrf.mxu0
  %v908 = vadd.f32 0.0, %v907
  %v909 = vpop.f32.mrf.mxu0
  %v910 = vadd.f32 0.0, %v909
  %911 = vmatprep.mubr.bf16.mxu0 %v393
  %912 = vmatmul.mubr.bf16.gmra.mxu0 %v392
  %v913 = vpop.f32.mrf.mxu0
  %v914 = vadd.f32 0.0, %v913
  %v915 = vpop.f32.mrf.mxu0
  %v916 = vadd.f32 0.0, %v915
  %v917 = vpop.f32.mrf.mxu0
  %v918 = vadd.f32 0.0, %v917
  %v919 = vpop.f32.mrf.mxu0
  %v920 = vadd.f32 0.0, %v919
  %921 = vmatprep.mubr.bf16.mxu0 %v396
  %922 = vmatmul.mubr.bf16.gmra.mxu0 %v395
  %v923 = vpop.f32.mrf.mxu0
  %v924 = vadd.f32 0.0, %v923
  %v925 = vpop.f32.mrf.mxu0
  %v926 = vadd.f32 0.0, %v925
  %v927 = vpop.f32.mrf.mxu0
  %v928 = vadd.f32 0.0, %v927
  %v929 = vpop.f32.mrf.mxu0
  %v930 = vadd.f32 0.0, %v929
  %931 = vdwg.mxu0
  %932 = vmatprep.subr.bf16.mxu0 0
  %933 = vmatpush1.bf16.msra.mxu0 0
  %934 = vmatprep.subr.bf16.mxu0 0
  %935 = vmatpush1.bf16.msra.mxu0 0
  %936 = vmatprep.subr.bf16.mxu0 0
  %937 = vmatpush1.bf16.msra.mxu0 0
  %938 = vmatprep.subr.bf16.mxu0 0
  %939 = vmatpush1.bf16.msra.mxu0 0
  %940 = vmatprep.subr.bf16.mxu0 %v597
  %941 = vmatpush1.bf16.msra.mxu0 %v596
  %942 = vmatprep.subr.bf16.mxu0 %v595
  %943 = vmatpush1.bf16.msra.mxu0 %v594
  %944 = vmatprep.subr.bf16.mxu0 %v593
  %945 = vmatpush1.bf16.msra.mxu0 %v592
  %946 = vmatprep.subr.bf16.mxu0 %v591
  %947 = vmatpush1.bf16.msra.mxu0 %v590
  %948 = vmatprep.subr.bf16.mxu0 0
  %949 = vmatpush2.bf16.msra.mxu0 0
  %950 = vmatprep.subr.bf16.mxu0 0
  %951 = vmatpush2.bf16.msra.mxu0 0
  %952 = vmatprep.subr.bf16.mxu0 0
  %953 = vmatpush2.bf16.msra.mxu0 0
  %954 = vmatprep.subr.bf16.mxu0 0
  %955 = vmatpush2.bf16.msra.mxu0 0
  %956 = vmatprep.subr.bf16.mxu0 0
  %957 = vmatpush2.bf16.msra.mxu0 0
  %958 = vmatprep.subr.bf16.mxu0 0
  %959 = vmatpush2.bf16.msra.mxu0 0
  %960 = vmatprep.subr.bf16.mxu0 0
  %961 = vmatpush2.bf16.msra.mxu0 0
  %962 = vmatprep.subr.bf16.mxu0 0
  %963 = vmatpush2.bf16.msra.mxu0 0
  %964 = vmatprep.mubr.bf16.mxu0 0
  %965 = vmatmul.mubr.bf16.gmra.mxu0 %v640
  %v966 = vpop.f32.mrf.mxu0
  %v967 = vadd.f32 %v734, %v966
  %v968 = vpop.f32.mrf.mxu0
  %v969 = vadd.f32 %v736, %v968
  %v970 = vpop.f32.mrf.mxu0
  %v971 = vadd.f32 %v738, %v970
  %v972 = vpop.f32.mrf.mxu0
  %v973 = vadd.f32 %v740, %v972
  %974 = vmatprep.mubr.bf16.mxu0 0
  %975 = vmatmul.mubr.bf16.gmra.mxu0 %v643
  %v976 = vpop.f32.mrf.mxu0
  %v977 = vadd.f32 %v744, %v976
  %v978 = vpop.f32.mrf.mxu0
  %v979 = vadd.f32 %v746, %v978
  %v980 = vpop.f32.mrf.mxu0
  %v981 = vadd.f32 %v748, %v980
  %v982 = vpop.f32.mrf.mxu0
  %v983 = vadd.f32 %v750, %v982
  %984 = vmatprep.mubr.bf16.mxu0 0
  %985 = vmatmul.mubr.bf16.gmra.mxu0 %v646
  %v986 = vpop.f32.mrf.mxu0
  %v987 = vadd.f32 %v754, %v986
  %v988 = vpop.f32.mrf.mxu0
  %v989 = vadd.f32 %v756, %v988
  %v990 = vpop.f32.mrf.mxu0
  %v991 = vadd.f32 %v758, %v990
  %v992 = vpop.f32.mrf.mxu0
  %v993 = vadd.f32 %v760, %v992
  %994 = vmatprep.mubr.bf16.mxu0 0
  %995 = vmatmul.mubr.bf16.gmra.mxu0 %v649
  %v996 = vpop.f32.mrf.mxu0
  %v997 = vadd.f32 %v764, %v996
  %v998 = vpop.f32.mrf.mxu0
  %v999 = vadd.f32 %v766, %v998
  %v1000 = vpop.f32.mrf.mxu0
  %v1001 = vadd.f32 %v768, %v1000
  %v1002 = vpop.f32.mrf.mxu0
  %v1003 = vadd.f32 %v770, %v1002
  %1004 = vmatprep.mubr.bf16.mxu0 0
  %1005 = vmatmul.mubr.bf16.gmra.mxu0 %v652
  %v1006 = vpop.f32.mrf.mxu0
  %v1007 = vadd.f32 %v774, %v1006
  %v1008 = vpop.f32.mrf.mxu0
  %v1009 = vadd.f32 %v776, %v1008
  %v1010 = vpop.f32.mrf.mxu0
  %v1011 = vadd.f32 %v778, %v1010
  %v1012 = vpop.f32.mrf.mxu0
  %v1013 = vadd.f32 %v780, %v1012
  %1014 = vmatprep.mubr.bf16.mxu0 0
  %1015 = vmatmul.mubr.bf16.gmra.mxu0 %v655
  %v1016 = vpop.f32.mrf.mxu0
  %v1017 = vadd.f32 %v784, %v1016
  %v1018 = vpop.f32.mrf.mxu0
  %v1019 = vadd.f32 %v786, %v1018
  %v1020 = vpop.f32.mrf.mxu0
  %v1021 = vadd.f32 %v788, %v1020
  %v1022 = vpop.f32.mrf.mxu0
  %v1023 = vadd.f32 %v790, %v1022
  %1024 = vmatprep.mubr.bf16.mxu0 0
  %1025 = vmatmul.mubr.bf16.gmra.mxu0 %v658
  %v1026 = vpop.f32.mrf.mxu0
  %v1027 = vadd.f32 %v794, %v1026
  %v1028 = vpop.f32.mrf.mxu0
  %v1029 = vadd.f32 %v796, %v1028
  %v1030 = vpop.f32.mrf.mxu0
  %v1031 = vadd.f32 %v798, %v1030
  %v1032 = vpop.f32.mrf.mxu0
  %v1033 = vadd.f32 %v800, %v1032
  %1034 = vmatprep.mubr.bf16.mxu0 0
  %1035 = vmatmul.mubr.bf16.gmra.mxu0 %v661
  %v1036 = vpop.f32.mrf.mxu0
  %v1037 = vadd.f32 %v804, %v1036
  %v1038 = vpop.f32.mrf.mxu0
  %v1039 = vadd.f32 %v806, %v1038
  %v1040 = vpop.f32.mrf.mxu0
  %v1041 = vadd.f32 %v808, %v1040
  %v1042 = vpop.f32.mrf.mxu0
  %v1043 = vadd.f32 %v810, %v1042
  %1044 = vmatprep.mubr.bf16.mxu0 0
  %1045 = vmatmul.mubr.bf16.gmra.mxu0 %v664
  %v1046 = vpop.f32.mrf.mxu0
  %v1047 = vadd.f32 %v814, %v1046
  %v1048 = vpop.f32.mrf.mxu0
  %v1049 = vadd.f32 %v816, %v1048
  %v1050 = vpop.f32.mrf.mxu0
  %v1051 = vadd.f32 %v818, %v1050
  %v1052 = vpop.f32.mrf.mxu0
  %v1053 = vadd.f32 %v820, %v1052
  %1054 = vmatprep.mubr.bf16.mxu0 0
  %1055 = vmatmul.mubr.bf16.gmra.mxu0 %v667
  %v1056 = vpop.f32.mrf.mxu0
  %v1057 = vadd.f32 %v824, %v1056
  %v1058 = vpop.f32.mrf.mxu0
  %v1059 = vadd.f32 %v826, %v1058
  %v1060 = vpop.f32.mrf.mxu0
  %v1061 = vadd.f32 %v828, %v1060
  %v1062 = vpop.f32.mrf.mxu0
  %v1063 = vadd.f32 %v830, %v1062
  %1064 = vmatprep.mubr.bf16.mxu0 0
  %1065 = vmatmul.mubr.bf16.gmra.mxu0 %v670
  %v1066 = vpop.f32.mrf.mxu0
  %v1067 = vadd.f32 %v834, %v1066
  %v1068 = vpop.f32.mrf.mxu0
  %v1069 = vadd.f32 %v836, %v1068
  %v1070 = vpop.f32.mrf.mxu0
  %v1071 = vadd.f32 %v838, %v1070
  %v1072 = vpop.f32.mrf.mxu0
  %v1073 = vadd.f32 %v840, %v1072
  %1074 = vmatprep.mubr.bf16.mxu0 0
  %1075 = vmatmul.mubr.bf16.gmra.mxu0 %v673
  %v1076 = vpop.f32.mrf.mxu0
  %v1077 = vadd.f32 %v844, %v1076
  %v1078 = vpop.f32.mrf.mxu0
  %v1079 = vadd.f32 %v846, %v1078
  %v1080 = vpop.f32.mrf.mxu0
  %v1081 = vadd.f32 %v848, %v1080
  %v1082 = vpop.f32.mrf.mxu0
  %v1083 = vadd.f32 %v850, %v1082
  %1084 = vmatprep.mubr.bf16.mxu0 0
  %1085 = vmatmul.mubr.bf16.gmra.mxu0 %v676
  %v1086 = vpop.f32.mrf.mxu0
  %v1087 = vadd.f32 %v854, %v1086
  %v1088 = vpop.f32.mrf.mxu0
  %v1089 = vadd.f32 %v856, %v1088
  %v1090 = vpop.f32.mrf.mxu0
  %v1091 = vadd.f32 %v858, %v1090
  %v1092 = vpop.f32.mrf.mxu0
  %v1093 = vadd.f32 %v860, %v1092
  %1094 = vmatprep.mubr.bf16.mxu0 0
  %1095 = vmatmul.mubr.bf16.gmra.mxu0 %v679
  %v1096 = vpop.f32.mrf.mxu0
  %v1097 = vadd.f32 %v864, %v1096
  %v1098 = vpop.f32.mrf.mxu0
  %v1099 = vadd.f32 %v866, %v1098
  %v1100 = vpop.f32.mrf.mxu0
  %v1101 = vadd.f32 %v868, %v1100
  %v1102 = vpop.f32.mrf.mxu0
  %v1103 = vadd.f32 %v870, %v1102
  %1104 = vmatprep.mubr.bf16.mxu0 0
  %1105 = vmatmul.mubr.bf16.gmra.mxu0 %v682
  %v1106 = vpop.f32.mrf.mxu0
  %v1107 = vadd.f32 %v874, %v1106
  %v1108 = vpop.f32.mrf.mxu0
  %v1109 = vadd.f32 %v876, %v1108
  %v1110 = vpop.f32.mrf.mxu0
  %v1111 = vadd.f32 %v878, %v1110
  %v1112 = vpop.f32.mrf.mxu0
  %v1113 = vadd.f32 %v880, %v1112
  %1114 = vmatprep.mubr.bf16.mxu0 0
  %1115 = vmatmul.mubr.bf16.gmra.mxu0 %v685
  %v1116 = vpop.f32.mrf.mxu0
  %v1117 = vadd.f32 %v884, %v1116
  %v1118 = vpop.f32.mrf.mxu0
  %v1119 = vadd.f32 %v886, %v1118
  %v1120 = vpop.f32.mrf.mxu0
  %v1121 = vadd.f32 %v888, %v1120
  %v1122 = vpop.f32.mrf.mxu0
  %v1123 = vadd.f32 %v890, %v1122
  %1124 = vmatprep.mubr.bf16.mxu0 0
  %1125 = vmatmul.mubr.bf16.gmra.mxu0 %v688
  %v1126 = vpop.f32.mrf.mxu0
  %v1127 = vadd.f32 %v894, %v1126
  %v1128 = vpop.f32.mrf.mxu0
  %v1129 = vadd.f32 %v896, %v1128
  %v1130 = vpop.f32.mrf.mxu0
  %v1131 = vadd.f32 %v898, %v1130
  %v1132 = vpop.f32.mrf.mxu0
  %v1133 = vadd.f32 %v900, %v1132
  %1134 = vmatprep.mubr.bf16.mxu0 0
  %1135 = vmatmul.mubr.bf16.gmra.mxu0 %v691
  %v1136 = vpop.f32.mrf.mxu0
  %v1137 = vadd.f32 %v904, %v1136
  %v1138 = vpop.f32.mrf.mxu0
  %v1139 = vadd.f32 %v906, %v1138
  %v1140 = vpop.f32.mrf.mxu0
  %v1141 = vadd.f32 %v908, %v1140
  %v1142 = vpop.f32.mrf.mxu0
  %v1143 = vadd.f32 %v910, %v1142
  %1144 = vmatprep.mubr.bf16.mxu0 0
  %1145 = vmatmul.mubr.bf16.gmra.mxu0 %v694
  %v1146 = vpop.f32.mrf.mxu0
  %v1147 = vadd.f32 %v914, %v1146
  %v1148 = vpop.f32.mrf.mxu0
  %v1149 = vadd.f32 %v916, %v1148
  %v1150 = vpop.f32.mrf.mxu0
  %v1151 = vadd.f32 %v918, %v1150
  %v1152 = vpop.f32.mrf.mxu0
  %v1153 = vadd.f32 %v920, %v1152
  %1154 = vmatprep.mubr.bf16.mxu0 0
  %1155 = vmatmul.mubr.bf16.gmra.mxu0 %v697
  %v1156 = vpop.f32.mrf.mxu0
  %v1157 = vadd.f32 %v924, %v1156
  %v1158 = vpop.f32.mrf.mxu0
  %v1159 = vadd.f32 %v926, %v1158
  %v1160 = vpop.f32.mrf.mxu0
  %v1161 = vadd.f32 %v928, %v1160
  %v1162 = vpop.f32.mrf.mxu0
  %v1163 = vadd.f32 %v930, %v1162
  %1164 = vdwg.mxu0
  %1165 = vst [vmem:[%s4] sm:$0xff] %v967
  %vm1166 = vcmask 556032
  %1167 = vst.msk [vmem:[%s4 + $0x8] sm:$0xff] %vm1166, %v969
  %1168 = vst [vmem:[%s4 + $0x10] sm:$0xff] %v971
  %1169 = vst.msk [vmem:[%s4 + $0x18] sm:$0xff] %vm1166, %v973
  %1170 = vst [vmem:[%s4 + $0x20] sm:$0xff] %v977
  %1171 = vst.msk [vmem:[%s4 + $0x28] sm:$0xff] %vm1166, %v979
  %1172 = vst [vmem:[%s4 + $0x30] sm:$0xff] %v981
  %1173 = vst.msk [vmem:[%s4 + $0x38] sm:$0xff] %vm1166, %v983
  %1174 = vst [vmem:[%s4 + $0x40] sm:$0xff] %v987
  %1175 = vst.msk [vmem:[%s4 + $0x48] sm:$0xff] %vm1166, %v989
  %1176 = vst [vmem:[%s4 + $0x50] sm:$0xff] %v991
  %1177 = vst.msk [vmem:[%s4 + $0x58] sm:$0xff] %vm1166, %v993
  %1178 = vst [vmem:[%s4 + $0x60] sm:$0xff] %v997
  %1179 = vst.msk [vmem:[%s4 + $0x68] sm:$0xff] %vm1166, %v999
  %1180 = vst [vmem:[%s4 + $0x70] sm:$0xff] %v1001
  %1181 = vst.msk [vmem:[%s4 + $0x78] sm:$0xff] %vm1166, %v1003
  %1182 = vst [vmem:[%s4 + $0x80] sm:$0xff] %v1007
  %1183 = vst.msk [vmem:[%s4 + $0x88] sm:$0xff] %vm1166, %v1009
  %1184 = vst [vmem:[%s4 + $0x90] sm:$0xff] %v1011
  %1185 = vst.msk [vmem:[%s4 + $0x98] sm:$0xff] %vm1166, %v1013
  %1186 = vst [vmem:[%s4 + $0xa0] sm:$0xff] %v1017
  %1187 = vst.msk [vmem:[%s4 + $0xa8] sm:$0xff] %vm1166, %v1019
  %1188 = vst [vmem:[%s4 + $0xb0] sm:$0xff] %v1021
  %1189 = vst.msk [vmem:[%s4 + $0xb8] sm:$0xff] %vm1166, %v1023
  %1190 = vst [vmem:[%s4 + $0xc0] sm:$0xff] %v1027
  %1191 = vst.msk [vmem:[%s4 + $0xc8] sm:$0xff] %vm1166, %v1029
  %1192 = vst [vmem:[%s4 + $0xd0] sm:$0xff] %v1031
  %1193 = vst.msk [vmem:[%s4 + $0xd8] sm:$0xff] %vm1166, %v1033
  %1194 = vst [vmem:[%s4 + $0xe0] sm:$0xff] %v1037
  %1195 = vst.msk [vmem:[%s4 + $0xe8] sm:$0xff] %vm1166, %v1039
  %1196 = vst [vmem:[%s4 + $0xf0] sm:$0xff] %v1041
  %1197 = vst.msk [vmem:[%s4 + $0xf8] sm:$0xff] %vm1166, %v1043
  %1198 = vst [vmem:[%s4 + $0x100] sm:$0xff] %v1047
  %1199 = vst.msk [vmem:[%s4 + $0x108] sm:$0xff] %vm1166, %v1049
  %1200 = vst [vmem:[%s4 + $0x110] sm:$0xff] %v1051
  %1201 = vst.msk [vmem:[%s4 + $0x118] sm:$0xff] %vm1166, %v1053
  %1202 = vst [vmem:[%s4 + $0x120] sm:$0xff] %v1057
  %1203 = vst.msk [vmem:[%s4 + $0x128] sm:$0xff] %vm1166, %v1059
  %1204 = vst [vmem:[%s4 + $0x130] sm:$0xff] %v1061
  %1205 = vst.msk [vmem:[%s4 + $0x138] sm:$0xff] %vm1166, %v1063
  %1206 = vst [vmem:[%s4 + $0x140] sm:$0xff] %v1067
  %1207 = vst.msk [vmem:[%s4 + $0x148] sm:$0xff] %vm1166, %v1069
  %1208 = vst [vmem:[%s4 + $0x150] sm:$0xff] %v1071
  %1209 = vst.msk [vmem:[%s4 + $0x158] sm:$0xff] %vm1166, %v1073
  %1210 = vst [vmem:[%s4 + $0x160] sm:$0xff] %v1077
  %1211 = vst.msk [vmem:[%s4 + $0x168] sm:$0xff] %vm1166, %v1079
  %1212 = vst [vmem:[%s4 + $0x170] sm:$0xff] %v1081
  %1213 = vst.msk [vmem:[%s4 + $0x178] sm:$0xff] %vm1166, %v1083
  %1214 = vst [vmem:[%s4 + $0x180] sm:$0xff] %v1087
  %1215 = vst.msk [vmem:[%s4 + $0x188] sm:$0xff] %vm1166, %v1089
  %1216 = vst [vmem:[%s4 + $0x190] sm:$0xff] %v1091
  %1217 = vst.msk [vmem:[%s4 + $0x198] sm:$0xff] %vm1166, %v1093
  %1218 = vst [vmem:[%s4 + $0x1a0] sm:$0xff] %v1097
  %1219 = vst.msk [vmem:[%s4 + $0x1a8] sm:$0xff] %vm1166, %v1099
  %1220 = vst [vmem:[%s4 + $0x1b0] sm:$0xff] %v1101
  %1221 = vst.msk [vmem:[%s4 + $0x1b8] sm:$0xff] %vm1166, %v1103
  %1222 = vst [vmem:[%s4 + $0x1c0] sm:$0xff] %v1107
  %1223 = vst.msk [vmem:[%s4 + $0x1c8] sm:$0xff] %vm1166, %v1109
  %1224 = vst [vmem:[%s4 + $0x1d0] sm:$0xff] %v1111
  %1225 = vst.msk [vmem:[%s4 + $0x1d8] sm:$0xff] %vm1166, %v1113
  %1226 = vst [vmem:[%s4 + $0x1e0] sm:$0xff] %v1117
  %1227 = vst.msk [vmem:[%s4 + $0x1e8] sm:$0xff] %vm1166, %v1119
  %1228 = vst [vmem:[%s4 + $0x1f0] sm:$0xff] %v1121
  %1229 = vst.msk [vmem:[%s4 + $0x1f8] sm:$0xff] %vm1166, %v1123
  %1230 = vst [vmem:[%s4 + $0x200] sm:$0xff] %v1127
  %1231 = vst.msk [vmem:[%s4 + $0x208] sm:$0xff] %vm1166, %v1129
  %1232 = vst [vmem:[%s4 + $0x210] sm:$0xff] %v1131
  %1233 = vst.msk [vmem:[%s4 + $0x218] sm:$0xff] %vm1166, %v1133
  %1234 = vst [vmem:[%s4 + $0x220] sm:$0xff] %v1137
  %1235 = vst.msk [vmem:[%s4 + $0x228] sm:$0xff] %vm1166, %v1139
  %1236 = vst [vmem:[%s4 + $0x230] sm:$0xff] %v1141
  %1237 = vst.msk [vmem:[%s4 + $0x238] sm:$0xff] %vm1166, %v1143
  %1238 = vst [vmem:[%s4 + $0x240] sm:$0xff] %v1147
  %1239 = vst.msk [vmem:[%s4 + $0x248] sm:$0xff] %vm1166, %v1149
  %1240 = vst [vmem:[%s4 + $0x250] sm:$0xff] %v1151
  %1241 = vst.msk [vmem:[%s4 + $0x258] sm:$0xff] %vm1166, %v1153
  %1242 = vst [vmem:[%s4 + $0x260] sm:$0xff] %v1157
  %1243 = vst.msk [vmem:[%s4 + $0x268] sm:$0xff] %vm1166, %v1159
  %1244 = vst [vmem:[%s4 + $0x270] sm:$0xff] %v1161
  %1245 = vst.msk [vmem:[%s4 + $0x278] sm:$0xff] %vm1166, %v1163
  %v1246 = vsel %vm1166, %v969, 0.0
  %v1247 = vadd.f32 %v967, %v1246
  %1248 = vadd.xlane.f32.xlu0 %v1247
  %v1249 = vpop.xlane.xlu0 %1248
  %v1250 = vsel %vm1166, %v973, 0.0
  %v1251 = vadd.f32 %v971, %v1250
  %1252 = vadd.xlane.f32.xlu0 %v1251
  %v1253 = vpop.xlane.xlu0 %1252
  %v1254 = vsel %vm1166, %v979, 0.0
  %v1255 = vadd.f32 %v977, %v1254
  %1256 = vadd.xlane.f32.xlu0 %v1255
  %v1257 = vpop.xlane.xlu0 %1256
  %v1258 = vsel %vm1166, %v983, 0.0
  %v1259 = vadd.f32 %v981, %v1258
  %1260 = vadd.xlane.f32.xlu0 %v1259
  %v1261 = vpop.xlane.xlu0 %1260
  %v1262 = vsel %vm1166, %v989, 0.0
  %v1263 = vadd.f32 %v987, %v1262
  %1264 = vadd.xlane.f32.xlu0 %v1263
  %v1265 = vpop.xlane.xlu0 %1264
  %v1266 = vsel %vm1166, %v993, 0.0
  %v1267 = vadd.f32 %v991, %v1266
  %1268 = vadd.xlane.f32.xlu0 %v1267
  %v1269 = vpop.xlane.xlu0 %1268
  %v1270 = vsel %vm1166, %v999, 0.0
  %v1271 = vadd.f32 %v997, %v1270
  %1272 = vadd.xlane.f32.xlu0 %v1271
  %v1273 = vpop.xlane.xlu0 %1272
  %v1274 = vsel %vm1166, %v1003, 0.0
  %v1275 = vadd.f32 %v1001, %v1274
  %1276 = vadd.xlane.f32.xlu0 %v1275
  %v1277 = vpop.xlane.xlu0 %1276
  %v1278 = vsel %vm1166, %v1009, 0.0
  %v1279 = vadd.f32 %v1007, %v1278
  %1280 = vadd.xlane.f32.xlu0 %v1279
  %v1281 = vpop.xlane.xlu0 %1280
  %v1282 = vsel %vm1166, %v1013, 0.0
  %v1283 = vadd.f32 %v1011, %v1282
  %1284 = vadd.xlane.f32.xlu0 %v1283
  %v1285 = vpop.xlane.xlu0 %1284
  %v1286 = vsel %vm1166, %v1019, 0.0
  %v1287 = vadd.f32 %v1017, %v1286
  %1288 = vadd.xlane.f32.xlu0 %v1287
  %v1289 = vpop.xlane.xlu0 %1288
  %v1290 = vsel %vm1166, %v1023, 0.0
  %v1291 = vadd.f32 %v1021, %v1290
  %1292 = vadd.xlane.f32.xlu0 %v1291
  %v1293 = vpop.xlane.xlu0 %1292
  %v1294 = vsel %vm1166, %v1029, 0.0
  %v1295 = vadd.f32 %v1027, %v1294
  %1296 = vadd.xlane.f32.xlu0 %v1295
  %v1297 = vpop.xlane.xlu0 %1296
  %v1298 = vsel %vm1166, %v1033, 0.0
  %v1299 = vadd.f32 %v1031, %v1298
  %1300 = vadd.xlane.f32.xlu0 %v1299
  %v1301 = vpop.xlane.xlu0 %1300
  %v1302 = vsel %vm1166, %v1039, 0.0
  %v1303 = vadd.f32 %v1037, %v1302
  %1304 = vadd.xlane.f32.xlu0 %v1303
  %v1305 = vpop.xlane.xlu0 %1304
  %v1306 = vsel %vm1166, %v1043, 0.0
  %v1307 = vadd.f32 %v1041, %v1306
  %1308 = vadd.xlane.f32.xlu0 %v1307
  %v1309 = vpop.xlane.xlu0 %1308
  %v1310 = vsel %vm1166, %v1049, 0.0
  %v1311 = vadd.f32 %v1047, %v1310
  %1312 = vadd.xlane.f32.xlu0 %v1311
  %v1313 = vpop.xlane.xlu0 %1312
  %v1314 = vsel %vm1166, %v1053, 0.0
  %v1315 = vadd.f32 %v1051, %v1314
  %1316 = vadd.xlane.f32.xlu0 %v1315
  %v1317 = vpop.xlane.xlu0 %1316
  %v1318 = vsel %vm1166, %v1059, 0.0
  %v1319 = vadd.f32 %v1057, %v1318
  %1320 = vadd.xlane.f32.xlu0 %v1319
  %v1321 = vpop.xlane.xlu0 %1320
  %v1322 = vsel %vm1166, %v1063, 0.0
  %v1323 = vadd.f32 %v1061, %v1322
  %1324 = vadd.xlane.f32.xlu0 %v1323
  %v1325 = vpop.xlane.xlu0 %1324
  %v1326 = vsel %vm1166, %v1069, 0.0
  %v1327 = vadd.f32 %v1067, %v1326
  %1328 = vadd.xlane.f32.xlu0 %v1327
  %v1329 = vpop.xlane.xlu0 %1328
  %v1330 = vsel %vm1166, %v1073, 0.0
  %v1331 = vadd.f32 %v1071, %v1330
  %1332 = vadd.xlane.f32.xlu0 %v1331
  %v1333 = vpop.xlane.xlu0 %1332
  %v1334 = vsel %vm1166, %v1079, 0.0
  %v1335 = vadd.f32 %v1077, %v1334
  %1336 = vadd.xlane.f32.xlu0 %v1335
  %v1337 = vpop.xlane.xlu0 %1336
  %v1338 = vsel %vm1166, %v1083, 0.0
  %v1339 = vadd.f32 %v1081, %v1338
  %1340 = vadd.xlane.f32.xlu0 %v1339
  %v1341 = vpop.xlane.xlu0 %1340
  %v1342 = vsel %vm1166, %v1089, 0.0
  %v1343 = vadd.f32 %v1087, %v1342
  %1344 = vadd.xlane.f32.xlu0 %v1343
  %v1345 = vpop.xlane.xlu0 %1344
  %v1346 = vsel %vm1166, %v1093, 0.0
  %v1347 = vadd.f32 %v1091, %v1346
  %1348 = vadd.xlane.f32.xlu0 %v1347
  %v1349 = vpop.xlane.xlu0 %1348
  %v1350 = vsel %vm1166, %v1099, 0.0
  %v1351 = vadd.f32 %v1097, %v1350
  %1352 = vadd.xlane.f32.xlu0 %v1351
  %v1353 = vpop.xlane.xlu0 %1352
  %v1354 = vsel %vm1166, %v1103, 0.0
  %v1355 = vadd.f32 %v1101, %v1354
  %1356 = vadd.xlane.f32.xlu0 %v1355
  %v1357 = vpop.xlane.xlu0 %1356
  %v1358 = vsel %vm1166, %v1109, 0.0
  %v1359 = vadd.f32 %v1107, %v1358
  %1360 = vadd.xlane.f32.xlu0 %v1359
  %v1361 = vpop.xlane.xlu0 %1360
  %v1362 = vsel %vm1166, %v1113, 0.0
  %v1363 = vadd.f32 %v1111, %v1362
  %1364 = vadd.xlane.f32.xlu0 %v1363
  %v1365 = vpop.xlane.xlu0 %1364
  %v1366 = vsel %vm1166, %v1119, 0.0
  %v1367 = vadd.f32 %v1117, %v1366
  %1368 = vadd.xlane.f32.xlu0 %v1367
  %v1369 = vpop.xlane.xlu0 %1368
  %v1370 = vsel %vm1166, %v1123, 0.0
  %v1371 = vadd.f32 %v1121, %v1370
  %1372 = vadd.xlane.f32.xlu0 %v1371
  %v1373 = vpop.xlane.xlu0 %1372
  %v1374 = vsel %vm1166, %v1129, 0.0
  %v1375 = vadd.f32 %v1127, %v1374
  %1376 = vadd.xlane.f32.xlu0 %v1375
  %v1377 = vpop.xlane.xlu0 %1376
  %v1378 = vsel %vm1166, %v1133, 0.0
  %v1379 = vadd.f32 %v1131, %v1378
  %1380 = vadd.xlane.f32.xlu0 %v1379
  %v1381 = vpop.xlane.xlu0 %1380
  %v1382 = vsel %vm1166, %v1139, 0.0
  %v1383 = vadd.f32 %v1137, %v1382
  %1384 = vadd.xlane.f32.xlu0 %v1383
  %v1385 = vpop.xlane.xlu0 %1384
  %v1386 = vsel %vm1166, %v1143, 0.0
  %v1387 = vadd.f32 %v1141, %v1386
  %1388 = vadd.xlane.f32.xlu0 %v1387
  %v1389 = vpop.xlane.xlu0 %1388
  %v1390 = vsel %vm1166, %v1149, 0.0
  %v1391 = vadd.f32 %v1147, %v1390
  %1392 = vadd.xlane.f32.xlu0 %v1391
  %v1393 = vpop.xlane.xlu0 %1392
  %v1394 = vsel %vm1166, %v1153, 0.0
  %v1395 = vadd.f32 %v1151, %v1394
  %1396 = vadd.xlane.f32.xlu0 %v1395
  %v1397 = vpop.xlane.xlu0 %1396
  %v1398 = vsel %vm1166, %v1159, 0.0
  %v1399 = vadd.f32 %v1157, %v1398
  %1400 = vadd.xlane.f32.xlu0 %v1399
  %v1401 = vpop.xlane.xlu0 %1400
  %v1402 = vsel %vm1166, %v1163, 0.0
  %v1403 = vadd.f32 %v1161, %v1402
  %1404 = vadd.xlane.f32.xlu0 %v1403
  %v1405 = vpop.xlane.xlu0 %1404
  %v1406 = vadd.f32 %v1249, 0.0
  %v1407 = vadd.f32 %v1253, 0.0
  %v1408 = vadd.f32 %v1257, 0.0
  %v1409 = vadd.f32 %v1261, 0.0
  %v1410 = vadd.f32 %v1265, 0.0
  %v1411 = vadd.f32 %v1269, 0.0
  %v1412 = vadd.f32 %v1273, 0.0
  %v1413 = vadd.f32 %v1277, 0.0
  %v1414 = vadd.f32 %v1281, 0.0
  %v1415 = vadd.f32 %v1285, 0.0
  %v1416 = vadd.f32 %v1289, 0.0
  %v1417 = vadd.f32 %v1293, 0.0
  %v1418 = vadd.f32 %v1297, 0.0
  %v1419 = vadd.f32 %v1301, 0.0
  %v1420 = vadd.f32 %v1305, 0.0
  %v1421 = vadd.f32 %v1309, 0.0
  %v1422 = vadd.f32 %v1313, 0.0
  %v1423 = vadd.f32 %v1317, 0.0
  %v1424 = vadd.f32 %v1321, 0.0
  %v1425 = vadd.f32 %v1325, 0.0
  %v1426 = vadd.f32 %v1329, 0.0
  %v1427 = vadd.f32 %v1333, 0.0
  %v1428 = vadd.f32 %v1337, 0.0
  %v1429 = vadd.f32 %v1341, 0.0
  %v1430 = vadd.f32 %v1345, 0.0
  %v1431 = vadd.f32 %v1349, 0.0
  %v1432 = vadd.f32 %v1353, 0.0
  %v1433 = vadd.f32 %v1357, 0.0
  %v1434 = vadd.f32 %v1361, 0.0
  %v1435 = vadd.f32 %v1365, 0.0
  %v1436 = vadd.f32 %v1369, 0.0
  %v1437 = vadd.f32 %v1373, 0.0
  %v1438 = vadd.f32 %v1377, 0.0
  %v1439 = vadd.f32 %v1381, 0.0
  %v1440 = vadd.f32 %v1385, 0.0
  %v1441 = vadd.f32 %v1389, 0.0
  %v1442 = vadd.f32 %v1393, 0.0
  %v1443 = vadd.f32 %v1397, 0.0
  %v1444 = vadd.f32 %v1401, 0.0
  %v1445 = vadd.f32 %v1405, 0.0
  %v1446 = vmul.f32 %v967, %v967
  %v1447 = vmul.f32 %v969, %v969
  %v1448 = vmul.f32 %v971, %v971
  %v1449 = vmul.f32 %v973, %v973
  %v1450 = vmul.f32 %v977, %v977
  %v1451 = vmul.f32 %v979, %v979
  %v1452 = vmul.f32 %v981, %v981
  %v1453 = vmul.f32 %v983, %v983
  %v1454 = vmul.f32 %v987, %v987
  %v1455 = vmul.f32 %v989, %v989
  %v1456 = vmul.f32 %v991, %v991
  %v1457 = vmul.f32 %v993, %v993
  %v1458 = vmul.f32 %v997, %v997
  %v1459 = vmul.f32 %v999, %v999
  %v1460 = vmul.f32 %v1001, %v1001
  %v1461 = vmul.f32 %v1003, %v1003
  %v1462 = vmul.f32 %v1007, %v1007
  %v1463 = vmul.f32 %v1009, %v1009
  %v1464 = vmul.f32 %v1011, %v1011
  %v1465 = vmul.f32 %v1013, %v1013
  %v1466 = vmul.f32 %v1017, %v1017
  %v1467 = vmul.f32 %v1019, %v1019
  %v1468 = vmul.f32 %v1021, %v1021
  %v1469 = vmul.f32 %v1023, %v1023
  %v1470 = vmul.f32 %v1027, %v1027
  %v1471 = vmul.f32 %v1029, %v1029
  %v1472 = vmul.f32 %v1031, %v1031
  %v1473 = vmul.f32 %v1033, %v1033
  %v1474 = vmul.f32 %v1037, %v1037
  %v1475 = vmul.f32 %v1039, %v1039
  %v1476 = vmul.f32 %v1041, %v1041
  %v1477 = vmul.f32 %v1043, %v1043
  %v1478 = vmul.f32 %v1047, %v1047
  %v1479 = vmul.f32 %v1049, %v1049
  %v1480 = vmul.f32 %v1051, %v1051
  %v1481 = vmul.f32 %v1053, %v1053
  %v1482 = vmul.f32 %v1057, %v1057
  %v1483 = vmul.f32 %v1059, %v1059
  %v1484 = vmul.f32 %v1061, %v1061
  %v1485 = vmul.f32 %v1063, %v1063
  %v1486 = vmul.f32 %v1067, %v1067
  %v1487 = vmul.f32 %v1069, %v1069
  %v1488 = vmul.f32 %v1071, %v1071
  %v1489 = vmul.f32 %v1073, %v1073
  %v1490 = vmul.f32 %v1077, %v1077
  %v1491 = vmul.f32 %v1079, %v1079
  %v1492 = vmul.f32 %v1081, %v1081
  %v1493 = vmul.f32 %v1083, %v1083
  %v1494 = vmul.f32 %v1087, %v1087
  %v1495 = vmul.f32 %v1089, %v1089
  %v1496 = vmul.f32 %v1091, %v1091
  %v1497 = vmul.f32 %v1093, %v1093
  %v1498 = vmul.f32 %v1097, %v1097
  %v1499 = vmul.f32 %v1099, %v1099
  %v1500 = vmul.f32 %v1101, %v1101
  %v1501 = vmul.f32 %v1103, %v1103
  %v1502 = vmul.f32 %v1107, %v1107
  %v1503 = vmul.f32 %v1109, %v1109
  %v1504 = vmul.f32 %v1111, %v1111
  %v1505 = vmul.f32 %v1113, %v1113
  %v1506 = vmul.f32 %v1117, %v1117
  %v1507 = vmul.f32 %v1119, %v1119
  %v1508 = vmul.f32 %v1121, %v1121
  %v1509 = vmul.f32 %v1123, %v1123
  %v1510 = vmul.f32 %v1127, %v1127
  %v1511 = vmul.f32 %v1129, %v1129
  %v1512 = vmul.f32 %v1131, %v1131
  %v1513 = vmul.f32 %v1133, %v1133
  %v1514 = vmul.f32 %v1137, %v1137
  %v1515 = vmul.f32 %v1139, %v1139
  %v1516 = vmul.f32 %v1141, %v1141
  %v1517 = vmul.f32 %v1143, %v1143
  %v1518 = vmul.f32 %v1147, %v1147
  %v1519 = vmul.f32 %v1149, %v1149
  %v1520 = vmul.f32 %v1151, %v1151
  %v1521 = vmul.f32 %v1153, %v1153
  %v1522 = vmul.f32 %v1157, %v1157
  %v1523 = vmul.f32 %v1159, %v1159
  %v1524 = vmul.f32 %v1161, %v1161
  %v1525 = vmul.f32 %v1163, %v1163
  %v1526 = vsel %vm1166, %v1447, 0.0
  %v1527 = vadd.f32 %v1446, %v1526
  %1528 = vadd.xlane.f32.xlu0 %v1527
  %v1529 = vpop.xlane.xlu0 %1528
  %v1530 = vsel %vm1166, %v1449, 0.0
  %v1531 = vadd.f32 %v1448, %v1530
  %1532 = vadd.xlane.f32.xlu0 %v1531
  %v1533 = vpop.xlane.xlu0 %1532
  %v1534 = vsel %vm1166, %v1451, 0.0
  %v1535 = vadd.f32 %v1450, %v1534
  %1536 = vadd.xlane.f32.xlu0 %v1535
  %v1537 = vpop.xlane.xlu0 %1536
  %v1538 = vsel %vm1166, %v1453, 0.0
  %v1539 = vadd.f32 %v1452, %v1538
  %1540 = vadd.xlane.f32.xlu0 %v1539
  %v1541 = vpop.xlane.xlu0 %1540
  %v1542 = vsel %vm1166, %v1455, 0.0
  %v1543 = vadd.f32 %v1454, %v1542
  %1544 = vadd.xlane.f32.xlu0 %v1543
  %v1545 = vpop.xlane.xlu0 %1544
  %v1546 = vsel %vm1166, %v1457, 0.0
  %v1547 = vadd.f32 %v1456, %v1546
  %1548 = vadd.xlane.f32.xlu0 %v1547
  %v1549 = vpop.xlane.xlu0 %1548
  %v1550 = vsel %vm1166, %v1459, 0.0
  %v1551 = vadd.f32 %v1458, %v1550
  %1552 = vadd.xlane.f32.xlu0 %v1551
  %v1553 = vpop.xlane.xlu0 %1552
  %v1554 = vsel %vm1166, %v1461, 0.0
  %v1555 = vadd.f32 %v1460, %v1554
  %1556 = vadd.xlane.f32.xlu0 %v1555
  %v1557 = vpop.xlane.xlu0 %1556
  %v1558 = vsel %vm1166, %v1463, 0.0
  %v1559 = vadd.f32 %v1462, %v1558
  %1560 = vadd.xlane.f32.xlu0 %v1559
  %v1561 = vpop.xlane.xlu0 %1560
  %v1562 = vsel %vm1166, %v1465, 0.0
  %v1563 = vadd.f32 %v1464, %v1562
  %1564 = vadd.xlane.f32.xlu0 %v1563
  %v1565 = vpop.xlane.xlu0 %1564
  %v1566 = vsel %vm1166, %v1467, 0.0
  %v1567 = vadd.f32 %v1466, %v1566
  %1568 = vadd.xlane.f32.xlu0 %v1567
  %v1569 = vpop.xlane.xlu0 %1568
  %v1570 = vsel %vm1166, %v1469, 0.0
  %v1571 = vadd.f32 %v1468, %v1570
  %1572 = vadd.xlane.f32.xlu0 %v1571
  %v1573 = vpop.xlane.xlu0 %1572
  %v1574 = vsel %vm1166, %v1471, 0.0
  %v1575 = vadd.f32 %v1470, %v1574
  %1576 = vadd.xlane.f32.xlu0 %v1575
  %v1577 = vpop.xlane.xlu0 %1576
  %v1578 = vsel %vm1166, %v1473, 0.0
  %v1579 = vadd.f32 %v1472, %v1578
  %1580 = vadd.xlane.f32.xlu0 %v1579
  %v1581 = vpop.xlane.xlu0 %1580
  %v1582 = vsel %vm1166, %v1475, 0.0
  %v1583 = vadd.f32 %v1474, %v1582
  %1584 = vadd.xlane.f32.xlu0 %v1583
  %v1585 = vpop.xlane.xlu0 %1584
  %v1586 = vsel %vm1166, %v1477, 0.0
  %v1587 = vadd.f32 %v1476, %v1586
  %1588 = vadd.xlane.f32.xlu0 %v1587
  %v1589 = vpop.xlane.xlu0 %1588
  %v1590 = vsel %vm1166, %v1479, 0.0
  %v1591 = vadd.f32 %v1478, %v1590
  %1592 = vadd.xlane.f32.xlu0 %v1591
  %v1593 = vpop.xlane.xlu0 %1592
  %v1594 = vsel %vm1166, %v1481, 0.0
  %v1595 = vadd.f32 %v1480, %v1594
  %1596 = vadd.xlane.f32.xlu0 %v1595
  %v1597 = vpop.xlane.xlu0 %1596
  %v1598 = vsel %vm1166, %v1483, 0.0
  %v1599 = vadd.f32 %v1482, %v1598
  %1600 = vadd.xlane.f32.xlu0 %v1599
  %v1601 = vpop.xlane.xlu0 %1600
  %v1602 = vsel %vm1166, %v1485, 0.0
  %v1603 = vadd.f32 %v1484, %v1602
  %1604 = vadd.xlane.f32.xlu0 %v1603
  %v1605 = vpop.xlane.xlu0 %1604
  %v1606 = vsel %vm1166, %v1487, 0.0
  %v1607 = vadd.f32 %v1486, %v1606
  %1608 = vadd.xlane.f32.xlu0 %v1607
  %v1609 = vpop.xlane.xlu0 %1608
  %v1610 = vsel %vm1166, %v1489, 0.0
  %v1611 = vadd.f32 %v1488, %v1610
  %1612 = vadd.xlane.f32.xlu0 %v1611
  %v1613 = vpop.xlane.xlu0 %1612
  %v1614 = vsel %vm1166, %v1491, 0.0
  %v1615 = vadd.f32 %v1490, %v1614
  %1616 = vadd.xlane.f32.xlu0 %v1615
  %v1617 = vpop.xlane.xlu0 %1616
  %v1618 = vsel %vm1166, %v1493, 0.0
  %v1619 = vadd.f32 %v1492, %v1618
  %1620 = vadd.xlane.f32.xlu0 %v1619
  %v1621 = vpop.xlane.xlu0 %1620
  %v1622 = vsel %vm1166, %v1495, 0.0
  %v1623 = vadd.f32 %v1494, %v1622
  %1624 = vadd.xlane.f32.xlu0 %v1623
  %v1625 = vpop.xlane.xlu0 %1624
  %v1626 = vsel %vm1166, %v1497, 0.0
  %v1627 = vadd.f32 %v1496, %v1626
  %1628 = vadd.xlane.f32.xlu0 %v1627
  %v1629 = vpop.xlane.xlu0 %1628
  %v1630 = vsel %vm1166, %v1499, 0.0
  %v1631 = vadd.f32 %v1498, %v1630
  %1632 = vadd.xlane.f32.xlu0 %v1631
  %v1633 = vpop.xlane.xlu0 %1632
  %v1634 = vsel %vm1166, %v1501, 0.0
  %v1635 = vadd.f32 %v1500, %v1634
  %1636 = vadd.xlane.f32.xlu0 %v1635
  %v1637 = vpop.xlane.xlu0 %1636
  %v1638 = vsel %vm1166, %v1503, 0.0
  %v1639 = vadd.f32 %v1502, %v1638
  %1640 = vadd.xlane.f32.xlu0 %v1639
  %v1641 = vpop.xlane.xlu0 %1640
  %v1642 = vsel %vm1166, %v1505, 0.0
  %v1643 = vadd.f32 %v1504, %v1642
  %1644 = vadd.xlane.f32.xlu0 %v1643
  %v1645 = vpop.xlane.xlu0 %1644
  %v1646 = vsel %vm1166, %v1507, 0.0
  %v1647 = vadd.f32 %v1506, %v1646
  %1648 = vadd.xlane.f32.xlu0 %v1647
  %v1649 = vpop.xlane.xlu0 %1648
  %v1650 = vsel %vm1166, %v1509, 0.0
  %v1651 = vadd.f32 %v1508, %v1650
  %1652 = vadd.xlane.f32.xlu0 %v1651
  %v1653 = vpop.xlane.xlu0 %1652
  %v1654 = vsel %vm1166, %v1511, 0.0
  %v1655 = vadd.f32 %v1510, %v1654
  %1656 = vadd.xlane.f32.xlu0 %v1655
  %v1657 = vpop.xlane.xlu0 %1656
  %v1658 = vsel %vm1166, %v1513, 0.0
  %v1659 = vadd.f32 %v1512, %v1658
  %1660 = vadd.xlane.f32.xlu0 %v1659
  %v1661 = vpop.xlane.xlu0 %1660
  %v1662 = vsel %vm1166, %v1515, 0.0
  %v1663 = vadd.f32 %v1514, %v1662
  %1664 = vadd.xlane.f32.xlu0 %v1663
  %v1665 = vpop.xlane.xlu0 %1664
  %v1666 = vsel %vm1166, %v1517, 0.0
  %v1667 = vadd.f32 %v1516, %v1666
  %1668 = vadd.xlane.f32.xlu0 %v1667
  %v1669 = vpop.xlane.xlu0 %1668
  %v1670 = vsel %vm1166, %v1519, 0.0
  %v1671 = vadd.f32 %v1518, %v1670
  %1672 = vadd.xlane.f32.xlu0 %v1671
  %v1673 = vpop.xlane.xlu0 %1672
  %v1674 = vsel %vm1166, %v1521, 0.0
  %v1675 = vadd.f32 %v1520, %v1674
  %1676 = vadd.xlane.f32.xlu0 %v1675
  %v1677 = vpop.xlane.xlu0 %1676
  %v1678 = vsel %vm1166, %v1523, 0.0
  %v1679 = vadd.f32 %v1522, %v1678
  %1680 = vadd.xlane.f32.xlu0 %v1679
  %v1681 = vpop.xlane.xlu0 %1680
  %v1682 = vsel %vm1166, %v1525, 0.0
  %v1683 = vadd.f32 %v1524, %v1682
  %1684 = vadd.xlane.f32.xlu0 %v1683
  %v1685 = vpop.xlane.xlu0 %1684
  %v1686 = vadd.f32 %v1529, 0.0
  %v1687 = vadd.f32 %v1533, 0.0
  %v1688 = vadd.f32 %v1537, 0.0
  %v1689 = vadd.f32 %v1541, 0.0
  %v1690 = vadd.f32 %v1545, 0.0
  %v1691 = vadd.f32 %v1549, 0.0
  %v1692 = vadd.f32 %v1553, 0.0
  %v1693 = vadd.f32 %v1557, 0.0
  %v1694 = vadd.f32 %v1561, 0.0
  %v1695 = vadd.f32 %v1565, 0.0
  %v1696 = vadd.f32 %v1569, 0.0
  %v1697 = vadd.f32 %v1573, 0.0
  %v1698 = vadd.f32 %v1577, 0.0
  %v1699 = vadd.f32 %v1581, 0.0
  %v1700 = vadd.f32 %v1585, 0.0
  %v1701 = vadd.f32 %v1589, 0.0
  %v1702 = vadd.f32 %v1593, 0.0
  %v1703 = vadd.f32 %v1597, 0.0
  %v1704 = vadd.f32 %v1601, 0.0
  %v1705 = vadd.f32 %v1605, 0.0
  %v1706 = vadd.f32 %v1609, 0.0
  %v1707 = vadd.f32 %v1613, 0.0
  %v1708 = vadd.f32 %v1617, 0.0
  %v1709 = vadd.f32 %v1621, 0.0
  %v1710 = vadd.f32 %v1625, 0.0
  %v1711 = vadd.f32 %v1629, 0.0
  %v1712 = vadd.f32 %v1633, 0.0
  %v1713 = vadd.f32 %v1637, 0.0
  %v1714 = vadd.f32 %v1641, 0.0
  %v1715 = vadd.f32 %v1645, 0.0
  %v1716 = vadd.f32 %v1649, 0.0
  %v1717 = vadd.f32 %v1653, 0.0
  %v1718 = vadd.f32 %v1657, 0.0
  %v1719 = vadd.f32 %v1661, 0.0
  %v1720 = vadd.f32 %v1665, 0.0
  %v1721 = vadd.f32 %v1669, 0.0
  %v1722 = vadd.f32 %v1673, 0.0
  %v1723 = vadd.f32 %v1677, 0.0
  %v1724 = vadd.f32 %v1681, 0.0
  %v1725 = vadd.f32 %v1685, 0.0
  %v1726 = vrcp.pop 196.0
  %v1727 = vmul.f32 %v1406, %v1726
  %v1728 = vmul.f32 %v1407, %v1726
  %v1729 = vmul.f32 %v1408, %v1726
  %v1730 = vmul.f32 %v1409, %v1726
  %v1731 = vmul.f32 %v1410, %v1726
  %v1732 = vmul.f32 %v1411, %v1726
  %v1733 = vmul.f32 %v1412, %v1726
  %v1734 = vmul.f32 %v1413, %v1726
  %v1735 = vmul.f32 %v1414, %v1726
  %v1736 = vmul.f32 %v1415, %v1726
  %v1737 = vmul.f32 %v1416, %v1726
  %v1738 = vmul.f32 %v1417, %v1726
  %v1739 = vmul.f32 %v1418, %v1726
  %v1740 = vmul.f32 %v1419, %v1726
  %v1741 = vmul.f32 %v1420, %v1726
  %v1742 = vmul.f32 %v1421, %v1726
  %v1743 = vmul.f32 %v1422, %v1726
  %v1744 = vmul.f32 %v1423, %v1726
  %v1745 = vmul.f32 %v1424, %v1726
  %v1746 = vmul.f32 %v1425, %v1726
  %v1747 = vmul.f32 %v1426, %v1726
  %v1748 = vmul.f32 %v1427, %v1726
  %v1749 = vmul.f32 %v1428, %v1726
  %v1750 = vmul.f32 %v1429, %v1726
  %v1751 = vmul.f32 %v1430, %v1726
  %v1752 = vmul.f32 %v1431, %v1726
  %v1753 = vmul.f32 %v1432, %v1726
  %v1754 = vmul.f32 %v1433, %v1726
  %v1755 = vmul.f32 %v1434, %v1726
  %v1756 = vmul.f32 %v1435, %v1726
  %v1757 = vmul.f32 %v1436, %v1726
  %v1758 = vmul.f32 %v1437, %v1726
  %v1759 = vmul.f32 %v1438, %v1726
  %v1760 = vmul.f32 %v1439, %v1726
  %v1761 = vmul.f32 %v1440, %v1726
  %v1762 = vmul.f32 %v1441, %v1726
  %v1763 = vmul.f32 %v1442, %v1726
  %v1764 = vmul.f32 %v1443, %v1726
  %v1765 = vmul.f32 %v1444, %v1726
  %v1766 = vmul.f32 %v1445, %v1726
  %v1767 = vmul.f32 %v1686, %v1726
  %v1768 = vmul.f32 %v1687, %v1726
  %v1769 = vmul.f32 %v1688, %v1726
  %v1770 = vmul.f32 %v1689, %v1726
  %v1771 = vmul.f32 %v1690, %v1726
  %v1772 = vmul.f32 %v1691, %v1726
  %v1773 = vmul.f32 %v1692, %v1726
  %v1774 = vmul.f32 %v1693, %v1726
  %v1775 = vmul.f32 %v1694, %v1726
  %v1776 = vmul.f32 %v1695, %v1726
  %v1777 = vmul.f32 %v1696, %v1726
  %v1778 = vmul.f32 %v1697, %v1726
  %v1779 = vmul.f32 %v1698, %v1726
  %v1780 = vmul.f32 %v1699, %v1726
  %v1781 = vmul.f32 %v1700, %v1726
  %v1782 = vmul.f32 %v1701, %v1726
  %v1783 = vmul.f32 %v1702, %v1726
  %v1784 = vmul.f32 %v1703, %v1726
  %v1785 = vmul.f32 %v1704, %v1726
  %v1786 = vmul.f32 %v1705, %v1726
  %v1787 = vmul.f32 %v1706, %v1726
  %v1788 = vmul.f32 %v1707, %v1726
  %v1789 = vmul.f32 %v1708, %v1726
  %v1790 = vmul.f32 %v1709, %v1726
  %v1791 = vmul.f32 %v1710, %v1726
  %v1792 = vmul.f32 %v1711, %v1726
  %v1793 = vmul.f32 %v1712, %v1726
  %v1794 = vmul.f32 %v1713, %v1726
  %v1795 = vmul.f32 %v1714, %v1726
  %v1796 = vmul.f32 %v1715, %v1726
  %v1797 = vmul.f32 %v1716, %v1726
  %v1798 = vmul.f32 %v1717, %v1726
  %v1799 = vmul.f32 %v1718, %v1726
  %v1800 = vmul.f32 %v1719, %v1726
  %v1801 = vmul.f32 %v1720, %v1726
  %v1802 = vmul.f32 %v1721, %v1726
  %v1803 = vmul.f32 %v1722, %v1726
  %v1804 = vmul.f32 %v1723, %v1726
  %v1805 = vmul.f32 %v1724, %v1726
  %v1806 = vmul.f32 %v1725, %v1726
  %v1807 = vmul.f32 %v1727, %v1727
  %v1808 = vmul.f32 %v1728, %v1728
  %v1809 = vmul.f32 %v1729, %v1729
  %v1810 = vmul.f32 %v1730, %v1730
  %v1811 = vmul.f32 %v1731, %v1731
  %v1812 = vmul.f32 %v1732, %v1732
  %v1813 = vmul.f32 %v1733, %v1733
  %v1814 = vmul.f32 %v1734, %v1734
  %v1815 = vmul.f32 %v1735, %v1735
  %v1816 = vmul.f32 %v1736, %v1736
  %v1817 = vmul.f32 %v1737, %v1737
  %v1818 = vmul.f32 %v1738, %v1738
  %v1819 = vmul.f32 %v1739, %v1739
  %v1820 = vmul.f32 %v1740, %v1740
  %v1821 = vmul.f32 %v1741, %v1741
  %v1822 = vmul.f32 %v1742, %v1742
  %v1823 = vmul.f32 %v1743, %v1743
  %v1824 = vmul.f32 %v1744, %v1744
  %v1825 = vmul.f32 %v1745, %v1745
  %v1826 = vmul.f32 %v1746, %v1746
  %v1827 = vmul.f32 %v1747, %v1747
  %v1828 = vmul.f32 %v1748, %v1748
  %v1829 = vmul.f32 %v1749, %v1749
  %v1830 = vmul.f32 %v1750, %v1750
  %v1831 = vmul.f32 %v1751, %v1751
  %v1832 = vmul.f32 %v1752, %v1752
  %v1833 = vmul.f32 %v1753, %v1753
  %v1834 = vmul.f32 %v1754, %v1754
  %v1835 = vmul.f32 %v1755, %v1755
  %v1836 = vmul.f32 %v1756, %v1756
  %v1837 = vmul.f32 %v1757, %v1757
  %v1838 = vmul.f32 %v1758, %v1758
  %v1839 = vmul.f32 %v1759, %v1759
  %v1840 = vmul.f32 %v1760, %v1760
  %v1841 = vmul.f32 %v1761, %v1761
  %v1842 = vmul.f32 %v1762, %v1762
  %v1843 = vmul.f32 %v1763, %v1763
  %v1844 = vmul.f32 %v1764, %v1764
  %v1845 = vmul.f32 %v1765, %v1765
  %v1846 = vmul.f32 %v1766, %v1766
  %v1847 = vsub.f32 %v1767, %v1807
  %v1848 = vsub.f32 %v1768, %v1808
  %v1849 = vsub.f32 %v1769, %v1809
  %v1850 = vsub.f32 %v1770, %v1810
  %v1851 = vsub.f32 %v1771, %v1811
  %v1852 = vsub.f32 %v1772, %v1812
  %v1853 = vsub.f32 %v1773, %v1813
  %v1854 = vsub.f32 %v1774, %v1814
  %v1855 = vsub.f32 %v1775, %v1815
  %v1856 = vsub.f32 %v1776, %v1816
  %v1857 = vsub.f32 %v1777, %v1817
  %v1858 = vsub.f32 %v1778, %v1818
  %v1859 = vsub.f32 %v1779, %v1819
  %v1860 = vsub.f32 %v1780, %v1820
  %v1861 = vsub.f32 %v1781, %v1821
  %v1862 = vsub.f32 %v1782, %v1822
  %v1863 = vsub.f32 %v1783, %v1823
  %v1864 = vsub.f32 %v1784, %v1824
  %v1865 = vsub.f32 %v1785, %v1825
  %v1866 = vsub.f32 %v1786, %v1826
  %v1867 = vsub.f32 %v1787, %v1827
  %v1868 = vsub.f32 %v1788, %v1828
  %v1869 = vsub.f32 %v1789, %v1829
  %v1870 = vsub.f32 %v1790, %v1830
  %v1871 = vsub.f32 %v1791, %v1831
  %v1872 = vsub.f32 %v1792, %v1832
  %v1873 = vsub.f32 %v1793, %v1833
  %v1874 = vsub.f32 %v1794, %v1834
  %v1875 = vsub.f32 %v1795, %v1835
  %v1876 = vsub.f32 %v1796, %v1836
  %v1877 = vsub.f32 %v1797, %v1837
  %v1878 = vsub.f32 %v1798, %v1838
  %v1879 = vsub.f32 %v1799, %v1839
  %v1880 = vsub.f32 %v1800, %v1840
  %v1881 = vsub.f32 %v1801, %v1841
  %v1882 = vsub.f32 %v1802, %v1842
  %v1883 = vsub.f32 %v1803, %v1843
  %v1884 = vsub.f32 %v1804, %v1844
  %v1885 = vsub.f32 %v1805, %v1845
  %v1886 = vsub.f32 %v1806, %v1846
  %v1887 = vadd.f32 %v1847, 1e-05
  %v1888 = vadd.f32 %v1848, 1e-05
  %v1889 = vadd.f32 %v1849, 1e-05
  %v1890 = vadd.f32 %v1850, 1e-05
  %v1891 = vadd.f32 %v1851, 1e-05
  %v1892 = vadd.f32 %v1852, 1e-05
  %v1893 = vadd.f32 %v1853, 1e-05
  %v1894 = vadd.f32 %v1854, 1e-05
  %v1895 = vadd.f32 %v1855, 1e-05
  %v1896 = vadd.f32 %v1856, 1e-05
  %v1897 = vadd.f32 %v1857, 1e-05
  %v1898 = vadd.f32 %v1858, 1e-05
  %v1899 = vadd.f32 %v1859, 1e-05
  %v1900 = vadd.f32 %v1860, 1e-05
  %v1901 = vadd.f32 %v1861, 1e-05
  %v1902 = vadd.f32 %v1862, 1e-05
  %v1903 = vadd.f32 %v1863, 1e-05
  %v1904 = vadd.f32 %v1864, 1e-05
  %v1905 = vadd.f32 %v1865, 1e-05
  %v1906 = vadd.f32 %v1866, 1e-05
  %v1907 = vadd.f32 %v1867, 1e-05
  %v1908 = vadd.f32 %v1868, 1e-05
  %v1909 = vadd.f32 %v1869, 1e-05
  %v1910 = vadd.f32 %v1870, 1e-05
  %v1911 = vadd.f32 %v1871, 1e-05
  %v1912 = vadd.f32 %v1872, 1e-05
  %v1913 = vadd.f32 %v1873, 1e-05
  %v1914 = vadd.f32 %v1874, 1e-05
  %v1915 = vadd.f32 %v1875, 1e-05
  %v1916 = vadd.f32 %v1876, 1e-05
  %v1917 = vadd.f32 %v1877, 1e-05
  %v1918 = vadd.f32 %v1878, 1e-05
  %v1919 = vadd.f32 %v1879, 1e-05
  %v1920 = vadd.f32 %v1880, 1e-05
  %v1921 = vadd.f32 %v1881, 1e-05
  %v1922 = vadd.f32 %v1882, 1e-05
  %v1923 = vadd.f32 %v1883, 1e-05
  %v1924 = vadd.f32 %v1884, 1e-05
  %v1925 = vadd.f32 %v1885, 1e-05
  %v1926 = vadd.f32 %v1886, 1e-05
  %v1927 = vrsqrt.pop %v1887
  %v1928 = vrsqrt.pop %v1888
  %v1929 = vrsqrt.pop %v1889
  %v1930 = vrsqrt.pop %v1890
  %v1931 = vrsqrt.pop %v1891
  %v1932 = vrsqrt.pop %v1892
  %v1933 = vrsqrt.pop %v1893
  %v1934 = vrsqrt.pop %v1894
  %v1935 = vrsqrt.pop %v1895
  %v1936 = vrsqrt.pop %v1896
  %v1937 = vrsqrt.pop %v1897
  %v1938 = vrsqrt.pop %v1898
  %v1939 = vrsqrt.pop %v1899
  %v1940 = vrsqrt.pop %v1900
  %v1941 = vrsqrt.pop %v1901
  %v1942 = vrsqrt.pop %v1902
  %v1943 = vrsqrt.pop %v1903
  %v1944 = vrsqrt.pop %v1904
  %v1945 = vrsqrt.pop %v1905
  %v1946 = vrsqrt.pop %v1906
  %v1947 = vrsqrt.pop %v1907
  %v1948 = vrsqrt.pop %v1908
  %v1949 = vrsqrt.pop %v1909
  %v1950 = vrsqrt.pop %v1910
  %v1951 = vrsqrt.pop %v1911
  %v1952 = vrsqrt.pop %v1912
  %v1953 = vrsqrt.pop %v1913
  %v1954 = vrsqrt.pop %v1914
  %v1955 = vrsqrt.pop %v1915
  %v1956 = vrsqrt.pop %v1916
  %v1957 = vrsqrt.pop %v1917
  %v1958 = vrsqrt.pop %v1918
  %v1959 = vrsqrt.pop %v1919
  %v1960 = vrsqrt.pop %v1920
  %v1961 = vrsqrt.pop %v1921
  %v1962 = vrsqrt.pop %v1922
  %v1963 = vrsqrt.pop %v1923
  %v1964 = vrsqrt.pop %v1924
  %v1965 = vrsqrt.pop %v1925
  %v1966 = vrsqrt.pop %v1926
  %v1967 = vld [vmem:[%s2] sm:$0xff]
  %v1968 = vld [vmem:[%s2 + $0x8] sm:$0xff]
  %v1969 = vld [vmem:[%s2 + $0x10] sm:$0xff]
  %v1970 = vld [vmem:[%s2 + $0x18] sm:$0xff]
  %v1971 = vld [vmem:[%s2 + $0x20] sm:$0xff]
  %v1972 = vld [vmem:[%s2 + $0x28] sm:$0xff]
  %v1973 = vld [vmem:[%s2 + $0x30] sm:$0xff]
  %v1974 = vld [vmem:[%s2 + $0x38] sm:$0xff]
  %v1975 = vld [vmem:[%s2 + $0x40] sm:$0xff]
  %v1976 = vld [vmem:[%s2 + $0x48] sm:$0xff]
  %v1977 = vld [vmem:[%s2 + $0x50] sm:$0xff]
  %v1978 = vld [vmem:[%s2 + $0x58] sm:$0xff]
  %v1979 = vld [vmem:[%s2 + $0x60] sm:$0xff]
  %v1980 = vld [vmem:[%s2 + $0x68] sm:$0xff]
  %v1981 = vld [vmem:[%s2 + $0x70] sm:$0xff]
  %v1982 = vld [vmem:[%s2 + $0x78] sm:$0xff]
  %v1983 = vld [vmem:[%s2 + $0x80] sm:$0xff]
  %v1984 = vld [vmem:[%s2 + $0x88] sm:$0xff]
  %v1985 = vld [vmem:[%s2 + $0x90] sm:$0xff]
  %v1986 = vld [vmem:[%s2 + $0x98] sm:$0xff]
  %v1987 = vld [vmem:[%s2 + $0xa0] sm:$0xff]
  %v1988 = vld [vmem:[%s2 + $0xa8] sm:$0xff]
  %v1989 = vld [vmem:[%s2 + $0xb0] sm:$0xff]
  %v1990 = vld [vmem:[%s2 + $0xb8] sm:$0xff]
  %v1991 = vld [vmem:[%s2 + $0xc0] sm:$0xff]
  %v1992 = vld [vmem:[%s2 + $0xc8] sm:$0xff]
  %v1993 = vld [vmem:[%s2 + $0xd0] sm:$0xff]
  %v1994 = vld [vmem:[%s2 + $0xd8] sm:$0xff]
  %v1995 = vld [vmem:[%s2 + $0xe0] sm:$0xff]
  %v1996 = vld [vmem:[%s2 + $0xe8] sm:$0xff]
  %v1997 = vld [vmem:[%s2 + $0xf0] sm:$0xff]
  %v1998 = vld [vmem:[%s2 + $0xf8] sm:$0xff]
  %v1999 = vld [vmem:[%s2 + $0x100] sm:$0xff]
  %v2000 = vld [vmem:[%s2 + $0x108] sm:$0xff]
  %v2001 = vld [vmem:[%s2 + $0x110] sm:$0xff]
  %v2002 = vld [vmem:[%s2 + $0x118] sm:$0xff]
  %v2003 = vld [vmem:[%s2 + $0x120] sm:$0xff]
  %v2004 = vld [vmem:[%s2 + $0x128] sm:$0xff]
  %v2005 = vld [vmem:[%s2 + $0x130] sm:$0xff]
  %v2006 = vld [vmem:[%s2 + $0x138] sm:$0xff]
  %v2007 = vmul.f32 %v1967, %v1927
  %v2008 = vmul.f32 %v1968, %v1928
  %v2009 = vmul.f32 %v1969, %v1929
  %v2010 = vmul.f32 %v1970, %v1930
  %v2011 = vmul.f32 %v1971, %v1931
  %v2012 = vmul.f32 %v1972, %v1932
  %v2013 = vmul.f32 %v1973, %v1933
  %v2014 = vmul.f32 %v1974, %v1934
  %v2015 = vmul.f32 %v1975, %v1935
  %v2016 = vmul.f32 %v1976, %v1936
  %v2017 = vmul.f32 %v1977, %v1937
  %v2018 = vmul.f32 %v1978, %v1938
  %v2019 = vmul.f32 %v1979, %v1939
  %v2020 = vmul.f32 %v1980, %v1940
  %v2021 = vmul.f32 %v1981, %v1941
  %v2022 = vmul.f32 %v1982, %v1942
  %v2023 = vmul.f32 %v1983, %v1943
  %v2024 = vmul.f32 %v1984, %v1944
  %v2025 = vmul.f32 %v1985, %v1945
  %v2026 = vmul.f32 %v1986, %v1946
  %v2027 = vmul.f32 %v1987, %v1947
  %v2028 = vmul.f32 %v1988, %v1948
  %v2029 = vmul.f32 %v1989, %v1949
  %v2030 = vmul.f32 %v1990, %v1950
  %v2031 = vmul.f32 %v1991, %v1951
  %v2032 = vmul.f32 %v1992, %v1952
  %v2033 = vmul.f32 %v1993, %v1953
  %v2034 = vmul.f32 %v1994, %v1954
  %v2035 = vmul.f32 %v1995, %v1955
  %v2036 = vmul.f32 %v1996, %v1956
  %v2037 = vmul.f32 %v1997, %v1957
  %v2038 = vmul.f32 %v1998, %v1958
  %v2039 = vmul.f32 %v1999, %v1959
  %v2040 = vmul.f32 %v2000, %v1960
  %v2041 = vmul.f32 %v2001, %v1961
  %v2042 = vmul.f32 %v2002, %v1962
  %v2043 = vmul.f32 %v2003, %v1963
  %v2044 = vmul.f32 %v2004, %v1964
  %v2045 = vmul.f32 %v2005, %v1965
  %v2046 = vmul.f32 %v2006, %v1966
  %v2047 = vld [vmem:[%s3] sm:$0xff]
  %v2048 = vld [vmem:[%s3 + $0x8] sm:$0xff]
  %v2049 = vld [vmem:[%s3 + $0x10] sm:$0xff]
  %v2050 = vld [vmem:[%s3 + $0x18] sm:$0xff]
  %v2051 = vld [vmem:[%s3 + $0x20] sm:$0xff]
  %v2052 = vld [vmem:[%s3 + $0x28] sm:$0xff]
  %v2053 = vld [vmem:[%s3 + $0x30] sm:$0xff]
  %v2054 = vld [vmem:[%s3 + $0x38] sm:$0xff]
  %v2055 = vld [vmem:[%s3 + $0x40] sm:$0xff]
  %v2056 = vld [vmem:[%s3 + $0x48] sm:$0xff]
  %v2057 = vld [vmem:[%s3 + $0x50] sm:$0xff]
  %v2058 = vld [vmem:[%s3 + $0x58] sm:$0xff]
  %v2059 = vld [vmem:[%s3 + $0x60] sm:$0xff]
  %v2060 = vld [vmem:[%s3 + $0x68] sm:$0xff]
  %v2061 = vld [vmem:[%s3 + $0x70] sm:$0xff]
  %v2062 = vld [vmem:[%s3 + $0x78] sm:$0xff]
  %v2063 = vld [vmem:[%s3 + $0x80] sm:$0xff]
  %v2064 = vld [vmem:[%s3 + $0x88] sm:$0xff]
  %v2065 = vld [vmem:[%s3 + $0x90] sm:$0xff]
  %v2066 = vld [vmem:[%s3 + $0x98] sm:$0xff]
  %v2067 = vld [vmem:[%s3 + $0xa0] sm:$0xff]
  %v2068 = vld [vmem:[%s3 + $0xa8] sm:$0xff]
  %v2069 = vld [vmem:[%s3 + $0xb0] sm:$0xff]
  %v2070 = vld [vmem:[%s3 + $0xb8] sm:$0xff]
  %v2071 = vld [vmem:[%s3 + $0xc0] sm:$0xff]
  %v2072 = vld [vmem:[%s3 + $0xc8] sm:$0xff]
  %v2073 = vld [vmem:[%s3 + $0xd0] sm:$0xff]
  %v2074 = vld [vmem:[%s3 + $0xd8] sm:$0xff]
  %v2075 = vld [vmem:[%s3 + $0xe0] sm:$0xff]
  %v2076 = vld [vmem:[%s3 + $0xe8] sm:$0xff]
  %v2077 = vld [vmem:[%s3 + $0xf0] sm:$0xff]
  %v2078 = vld [vmem:[%s3 + $0xf8] sm:$0xff]
  %v2079 = vld [vmem:[%s3 + $0x100] sm:$0xff]
  %v2080 = vld [vmem:[%s3 + $0x108] sm:$0xff]
  %v2081 = vld [vmem:[%s3 + $0x110] sm:$0xff]
  %v2082 = vld [vmem:[%s3 + $0x118] sm:$0xff]
  %v2083 = vld [vmem:[%s3 + $0x120] sm:$0xff]
  %v2084 = vld [vmem:[%s3 + $0x128] sm:$0xff]
  %v2085 = vld [vmem:[%s3 + $0x130] sm:$0xff]
  %v2086 = vld [vmem:[%s3 + $0x138] sm:$0xff]
  %v2087 = vmul.f32 %v1727, %v2007
  %v2088 = vmul.f32 %v1728, %v2008
  %v2089 = vmul.f32 %v1729, %v2009
  %v2090 = vmul.f32 %v1730, %v2010
  %v2091 = vmul.f32 %v1731, %v2011
  %v2092 = vmul.f32 %v1732, %v2012
  %v2093 = vmul.f32 %v1733, %v2013
  %v2094 = vmul.f32 %v1734, %v2014
  %v2095 = vmul.f32 %v1735, %v2015
  %v2096 = vmul.f32 %v1736, %v2016
  %v2097 = vmul.f32 %v1737, %v2017
  %v2098 = vmul.f32 %v1738, %v2018
  %v2099 = vmul.f32 %v1739, %v2019
  %v2100 = vmul.f32 %v1740, %v2020
  %v2101 = vmul.f32 %v1741, %v2021
  %v2102 = vmul.f32 %v1742, %v2022
  %v2103 = vmul.f32 %v1743, %v2023
  %v2104 = vmul.f32 %v1744, %v2024
  %v2105 = vmul.f32 %v1745, %v2025
  %v2106 = vmul.f32 %v1746, %v2026
  %v2107 = vmul.f32 %v1747, %v2027
  %v2108 = vmul.f32 %v1748, %v2028
  %v2109 = vmul.f32 %v1749, %v2029
  %v2110 = vmul.f32 %v1750, %v2030
  %v2111 = vmul.f32 %v1751, %v2031
  %v2112 = vmul.f32 %v1752, %v2032
  %v2113 = vmul.f32 %v1753, %v2033
  %v2114 = vmul.f32 %v1754, %v2034
  %v2115 = vmul.f32 %v1755, %v2035
  %v2116 = vmul.f32 %v1756, %v2036
  %v2117 = vmul.f32 %v1757, %v2037
  %v2118 = vmul.f32 %v1758, %v2038
  %v2119 = vmul.f32 %v1759, %v2039
  %v2120 = vmul.f32 %v1760, %v2040
  %v2121 = vmul.f32 %v1761, %v2041
  %v2122 = vmul.f32 %v1762, %v2042
  %v2123 = vmul.f32 %v1763, %v2043
  %v2124 = vmul.f32 %v1764, %v2044
  %v2125 = vmul.f32 %v1765, %v2045
  %v2126 = vmul.f32 %v1766, %v2046
  %v2127 = vsub.f32 %v2047, %v2087
  %v2128 = vsub.f32 %v2048, %v2088
  %v2129 = vsub.f32 %v2049, %v2089
  %v2130 = vsub.f32 %v2050, %v2090
  %v2131 = vsub.f32 %v2051, %v2091
  %v2132 = vsub.f32 %v2052, %v2092
  %v2133 = vsub.f32 %v2053, %v2093
  %v2134 = vsub.f32 %v2054, %v2094
  %v2135 = vsub.f32 %v2055, %v2095
  %v2136 = vsub.f32 %v2056, %v2096
  %v2137 = vsub.f32 %v2057, %v2097
  %v2138 = vsub.f32 %v2058, %v2098
  %v2139 = vsub.f32 %v2059, %v2099
  %v2140 = vsub.f32 %v2060, %v2100
  %v2141 = vsub.f32 %v2061, %v2101
  %v2142 = vsub.f32 %v2062, %v2102
  %v2143 = vsub.f32 %v2063, %v2103
  %v2144 = vsub.f32 %v2064, %v2104
  %v2145 = vsub.f32 %v2065, %v2105
  %v2146 = vsub.f32 %v2066, %v2106
  %v2147 = vsub.f32 %v2067, %v2107
  %v2148 = vsub.f32 %v2068, %v2108
  %v2149 = vsub.f32 %v2069, %v2109
  %v2150 = vsub.f32 %v2070, %v2110
  %v2151 = vsub.f32 %v2071, %v2111
  %v2152 = vsub.f32 %v2072, %v2112
  %v2153 = vsub.f32 %v2073, %v2113
  %v2154 = vsub.f32 %v2074, %v2114
  %v2155 = vsub.f32 %v2075, %v2115
  %v2156 = vsub.f32 %v2076, %v2116
  %v2157 = vsub.f32 %v2077, %v2117
  %v2158 = vsub.f32 %v2078, %v2118
  %v2159 = vsub.f32 %v2079, %v2119
  %v2160 = vsub.f32 %v2080, %v2120
  %v2161 = vsub.f32 %v2081, %v2121
  %v2162 = vsub.f32 %v2082, %v2122
  %v2163 = vsub.f32 %v2083, %v2123
  %v2164 = vsub.f32 %v2084, %v2124
  %v2165 = vsub.f32 %v2085, %v2125
  %v2166 = vsub.f32 %v2086, %v2126
  %v2167 = vld [vmem:[%s4] sm:$0xff]
  %v2168 = vld [vmem:[%s4 + $0x8] sm:$0xff]
  %v2169 = vld [vmem:[%s4 + $0x10] sm:$0xff]
  %v2170 = vld [vmem:[%s4 + $0x18] sm:$0xff]
  %v2171 = vld [vmem:[%s4 + $0x20] sm:$0xff]
  %v2172 = vld [vmem:[%s4 + $0x28] sm:$0xff]
  %v2173 = vld [vmem:[%s4 + $0x30] sm:$0xff]
  %v2174 = vld [vmem:[%s4 + $0x38] sm:$0xff]
  %v2175 = vld [vmem:[%s4 + $0x40] sm:$0xff]
  %v2176 = vld [vmem:[%s4 + $0x48] sm:$0xff]
  %v2177 = vld [vmem:[%s4 + $0x50] sm:$0xff]
  %v2178 = vld [vmem:[%s4 + $0x58] sm:$0xff]
  %v2179 = vld [vmem:[%s4 + $0x60] sm:$0xff]
  %v2180 = vld [vmem:[%s4 + $0x68] sm:$0xff]
  %v2181 = vld [vmem:[%s4 + $0x70] sm:$0xff]
  %v2182 = vld [vmem:[%s4 + $0x78] sm:$0xff]
  %v2183 = vld [vmem:[%s4 + $0x80] sm:$0xff]
  %v2184 = vld [vmem:[%s4 + $0x88] sm:$0xff]
  %v2185 = vld [vmem:[%s4 + $0x90] sm:$0xff]
  %v2186 = vld [vmem:[%s4 + $0x98] sm:$0xff]
  %v2187 = vld [vmem:[%s4 + $0xa0] sm:$0xff]
  %v2188 = vld [vmem:[%s4 + $0xa8] sm:$0xff]
  %v2189 = vld [vmem:[%s4 + $0xb0] sm:$0xff]
  %v2190 = vld [vmem:[%s4 + $0xb8] sm:$0xff]
  %v2191 = vld [vmem:[%s4 + $0xc0] sm:$0xff]
  %v2192 = vld [vmem:[%s4 + $0xc8] sm:$0xff]
  %v2193 = vld [vmem:[%s4 + $0xd0] sm:$0xff]
  %v2194 = vld [vmem:[%s4 + $0xd8] sm:$0xff]
  %v2195 = vld [vmem:[%s4 + $0xe0] sm:$0xff]
  %v2196 = vld [vmem:[%s4 + $0xe8] sm:$0xff]
  %v2197 = vld [vmem:[%s4 + $0xf0] sm:$0xff]
  %v2198 = vld [vmem:[%s4 + $0xf8] sm:$0xff]
  %v2199 = vld [vmem:[%s4 + $0x100] sm:$0xff]
  %v2200 = vld [vmem:[%s4 + $0x108] sm:$0xff]
  %v2201 = vld [vmem:[%s4 + $0x110] sm:$0xff]
  %v2202 = vld [vmem:[%s4 + $0x118] sm:$0xff]
  %v2203 = vld [vmem:[%s4 + $0x120] sm:$0xff]
  %v2204 = vld [vmem:[%s4 + $0x128] sm:$0xff]
  %v2205 = vld [vmem:[%s4 + $0x130] sm:$0xff]
  %v2206 = vld [vmem:[%s4 + $0x138] sm:$0xff]
  %v2207 = vld [vmem:[%s4 + $0x140] sm:$0xff]
  %v2208 = vld [vmem:[%s4 + $0x148] sm:$0xff]
  %v2209 = vld [vmem:[%s4 + $0x150] sm:$0xff]
  %v2210 = vld [vmem:[%s4 + $0x158] sm:$0xff]
  %v2211 = vld [vmem:[%s4 + $0x160] sm:$0xff]
  %v2212 = vld [vmem:[%s4 + $0x168] sm:$0xff]
  %v2213 = vld [vmem:[%s4 + $0x170] sm:$0xff]
  %v2214 = vld [vmem:[%s4 + $0x178] sm:$0xff]
  %v2215 = vld [vmem:[%s4 + $0x180] sm:$0xff]
  %v2216 = vld [vmem:[%s4 + $0x188] sm:$0xff]
  %v2217 = vld [vmem:[%s4 + $0x190] sm:$0xff]
  %v2218 = vld [vmem:[%s4 + $0x198] sm:$0xff]
  %v2219 = vld [vmem:[%s4 + $0x1a0] sm:$0xff]
  %v2220 = vld [vmem:[%s4 + $0x1a8] sm:$0xff]
  %v2221 = vld [vmem:[%s4 + $0x1b0] sm:$0xff]
  %v2222 = vld [vmem:[%s4 + $0x1b8] sm:$0xff]
  %v2223 = vld [vmem:[%s4 + $0x1c0] sm:$0xff]
  %v2224 = vld [vmem:[%s4 + $0x1c8] sm:$0xff]
  %v2225 = vld [vmem:[%s4 + $0x1d0] sm:$0xff]
  %v2226 = vld [vmem:[%s4 + $0x1d8] sm:$0xff]
  %v2227 = vld [vmem:[%s4 + $0x1e0] sm:$0xff]
  %v2228 = vld [vmem:[%s4 + $0x1e8] sm:$0xff]
  %v2229 = vld [vmem:[%s4 + $0x1f0] sm:$0xff]
  %v2230 = vld [vmem:[%s4 + $0x1f8] sm:$0xff]
  %v2231 = vld [vmem:[%s4 + $0x200] sm:$0xff]
  %v2232 = vld [vmem:[%s4 + $0x208] sm:$0xff]
  %v2233 = vld [vmem:[%s4 + $0x210] sm:$0xff]
  %v2234 = vld [vmem:[%s4 + $0x218] sm:$0xff]
  %v2235 = vld [vmem:[%s4 + $0x220] sm:$0xff]
  %v2236 = vld [vmem:[%s4 + $0x228] sm:$0xff]
  %v2237 = vld [vmem:[%s4 + $0x230] sm:$0xff]
  %v2238 = vld [vmem:[%s4 + $0x238] sm:$0xff]
  %v2239 = vld [vmem:[%s4 + $0x240] sm:$0xff]
  %v2240 = vld [vmem:[%s4 + $0x248] sm:$0xff]
  %v2241 = vld [vmem:[%s4 + $0x250] sm:$0xff]
  %v2242 = vld [vmem:[%s4 + $0x258] sm:$0xff]
  %v2243 = vld [vmem:[%s4 + $0x260] sm:$0xff]
  %v2244 = vld [vmem:[%s4 + $0x268] sm:$0xff]
  %v2245 = vld [vmem:[%s4 + $0x270] sm:$0xff]
  %v2246 = vld [vmem:[%s4 + $0x278] sm:$0xff]
  %2248 = vset.pattern.permute.xlu0 0
  %2249 = vperm.xlu0 %2248, %v2007
  %v2250 = vpop.permute.xlu0 %2249
  %2253 = vset.pattern.permute.xlu0 0
  %2254 = vperm.xlu0 %2253, %v2008
  %v2255 = vpop.permute.xlu0 %2254
  %2258 = vset.pattern.permute.xlu0 0
  %2259 = vperm.xlu0 %2258, %v2009
  %v2260 = vpop.permute.xlu0 %2259
  %2263 = vset.pattern.permute.xlu0 0
  %2264 = vperm.xlu0 %2263, %v2010
  %v2265 = vpop.permute.xlu0 %2264
  %2268 = vset.pattern.permute.xlu0 0
  %2269 = vperm.xlu0 %2268, %v2011
  %v2270 = vpop.permute.xlu0 %2269
  %2273 = vset.pattern.permute.xlu0 0
  %2274 = vperm.xlu0 %2273, %v2012
  %v2275 = vpop.permute.xlu0 %2274
  %2278 = vset.pattern.permute.xlu0 0
  %2279 = vperm.xlu0 %2278, %v2013
  %v2280 = vpop.permute.xlu0 %2279
  %2283 = vset.pattern.permute.xlu0 0
  %2284 = vperm.xlu0 %2283, %v2014
  %v2285 = vpop.permute.xlu0 %2284
  %2288 = vset.pattern.permute.xlu0 0
  %2289 = vperm.xlu0 %2288, %v2015
  %v2290 = vpop.permute.xlu0 %2289
  %2293 = vset.pattern.permute.xlu0 0
  %2294 = vperm.xlu0 %2293, %v2016
  %v2295 = vpop.permute.xlu0 %2294
  %2298 = vset.pattern.permute.xlu0 0
  %2299 = vperm.xlu0 %2298, %v2017
  %v2300 = vpop.permute.xlu0 %2299
  %2303 = vset.pattern.permute.xlu0 0
  %2304 = vperm.xlu0 %2303, %v2018
  %v2305 = vpop.permute.xlu0 %2304
  %2308 = vset.pattern.permute.xlu0 0
  %2309 = vperm.xlu0 %2308, %v2019
  %v2310 = vpop.permute.xlu0 %2309
  %2313 = vset.pattern.permute.xlu0 0
  %2314 = vperm.xlu0 %2313, %v2020
  %v2315 = vpop.permute.xlu0 %2314
  %2318 = vset.pattern.permute.xlu0 0
  %2319 = vperm.xlu0 %2318, %v2021
  %v2320 = vpop.permute.xlu0 %2319
  %2323 = vset.pattern.permute.xlu0 0
  %2324 = vperm.xlu0 %2323, %v2022
  %v2325 = vpop.permute.xlu0 %2324
  %2328 = vset.pattern.permute.xlu0 0
  %2329 = vperm.xlu0 %2328, %v2023
  %v2330 = vpop.permute.xlu0 %2329
  %2333 = vset.pattern.permute.xlu0 0
  %2334 = vperm.xlu0 %2333, %v2024
  %v2335 = vpop.permute.xlu0 %2334
  %2338 = vset.pattern.permute.xlu0 0
  %2339 = vperm.xlu0 %2338, %v2025
  %v2340 = vpop.permute.xlu0 %2339
  %2343 = vset.pattern.permute.xlu0 0
  %2344 = vperm.xlu0 %2343, %v2026
  %v2345 = vpop.permute.xlu0 %2344
  %2348 = vset.pattern.permute.xlu0 0
  %2349 = vperm.xlu0 %2348, %v2027
  %v2350 = vpop.permute.xlu0 %2349
  %2353 = vset.pattern.permute.xlu0 0
  %2354 = vperm.xlu0 %2353, %v2028
  %v2355 = vpop.permute.xlu0 %2354
  %2358 = vset.pattern.permute.xlu0 0
  %2359 = vperm.xlu0 %2358, %v2029
  %v2360 = vpop.permute.xlu0 %2359
  %2363 = vset.pattern.permute.xlu0 0
  %2364 = vperm.xlu0 %2363, %v2030
  %v2365 = vpop.permute.xlu0 %2364
  %2368 = vset.pattern.permute.xlu0 0
  %2369 = vperm.xlu0 %2368, %v2031
  %v2370 = vpop.permute.xlu0 %2369
  %2373 = vset.pattern.permute.xlu0 0
  %2374 = vperm.xlu0 %2373, %v2032
  %v2375 = vpop.permute.xlu0 %2374
  %2378 = vset.pattern.permute.xlu0 0
  %2379 = vperm.xlu0 %2378, %v2033
  %v2380 = vpop.permute.xlu0 %2379
  %2383 = vset.pattern.permute.xlu0 0
  %2384 = vperm.xlu0 %2383, %v2034
  %v2385 = vpop.permute.xlu0 %2384
  %2388 = vset.pattern.permute.xlu0 0
  %2389 = vperm.xlu0 %2388, %v2035
  %v2390 = vpop.permute.xlu0 %2389
  %2393 = vset.pattern.permute.xlu0 0
  %2394 = vperm.xlu0 %2393, %v2036
  %v2395 = vpop.permute.xlu0 %2394
  %2398 = vset.pattern.permute.xlu0 0
  %2399 = vperm.xlu0 %2398, %v2037
  %v2400 = vpop.permute.xlu0 %2399
  %2403 = vset.pattern.permute.xlu0 0
  %2404 = vperm.xlu0 %2403, %v2038
  %v2405 = vpop.permute.xlu0 %2404
  %2408 = vset.pattern.permute.xlu0 0
  %2409 = vperm.xlu0 %2408, %v2039
  %v2410 = vpop.permute.xlu0 %2409
  %2413 = vset.pattern.permute.xlu0 0
  %2414 = vperm.xlu0 %2413, %v2040
  %v2415 = vpop.permute.xlu0 %2414
  %2418 = vset.pattern.permute.xlu0 0
  %2419 = vperm.xlu0 %2418, %v2041
  %v2420 = vpop.permute.xlu0 %2419
  %2423 = vset.pattern.permute.xlu0 0
  %2424 = vperm.xlu0 %2423, %v2042
  %v2425 = vpop.permute.xlu0 %2424
  %2428 = vset.pattern.permute.xlu0 0
  %2429 = vperm.xlu0 %2428, %v2043
  %v2430 = vpop.permute.xlu0 %2429
  %2433 = vset.pattern.permute.xlu0 0
  %2434 = vperm.xlu0 %2433, %v2044
  %v2435 = vpop.permute.xlu0 %2434
  %2438 = vset.pattern.permute.xlu0 0
  %2439 = vperm.xlu0 %2438, %v2045
  %v2440 = vpop.permute.xlu0 %2439
  %2443 = vset.pattern.permute.xlu0 0
  %2444 = vperm.xlu0 %2443, %v2046
  %v2445 = vpop.permute.xlu0 %2444
  %v2447 = vmul.f32 %v2167, %v2250
  %v2448 = vmul.f32 %v2168, %v2250
  %v2449 = vmul.f32 %v2169, %v2255
  %v2450 = vmul.f32 %v2170, %v2255
  %v2451 = vmul.f32 %v2171, %v2260
  %v2452 = vmul.f32 %v2172, %v2260
  %v2453 = vmul.f32 %v2173, %v2265
  %v2454 = vmul.f32 %v2174, %v2265
  %v2455 = vmul.f32 %v2175, %v2270
  %v2456 = vmul.f32 %v2176, %v2270
  %v2457 = vmul.f32 %v2177, %v2275
  %v2458 = vmul.f32 %v2178, %v2275
  %v2459 = vmul.f32 %v2179, %v2280
  %v2460 = vmul.f32 %v2180, %v2280
  %v2461 = vmul.f32 %v2181, %v2285
  %v2462 = vmul.f32 %v2182, %v2285
  %v2463 = vmul.f32 %v2183, %v2290
  %v2464 = vmul.f32 %v2184, %v2290
  %v2465 = vmul.f32 %v2185, %v2295
  %v2466 = vmul.f32 %v2186, %v2295
  %v2467 = vmul.f32 %v2187, %v2300
  %v2468 = vmul.f32 %v2188, %v2300
  %v2469 = vmul.f32 %v2189, %v2305
  %v2470 = vmul.f32 %v2190, %v2305
  %v2471 = vmul.f32 %v2191, %v2310
  %v2472 = vmul.f32 %v2192, %v2310
  %v2473 = vmul.f32 %v2193, %v2315
  %v2474 = vmul.f32 %v2194, %v2315
  %v2475 = vmul.f32 %v2195, %v2320
  %v2476 = vmul.f32 %v2196, %v2320
  %v2477 = vmul.f32 %v2197, %v2325
  %v2478 = vmul.f32 %v2198, %v2325
  %v2479 = vmul.f32 %v2199, %v2330
  %v2480 = vmul.f32 %v2200, %v2330
  %v2481 = vmul.f32 %v2201, %v2335
  %v2482 = vmul.f32 %v2202, %v2335
  %v2483 = vmul.f32 %v2203, %v2340
  %v2484 = vmul.f32 %v2204, %v2340
  %v2485 = vmul.f32 %v2205, %v2345
  %v2486 = vmul.f32 %v2206, %v2345
  %v2487 = vmul.f32 %v2207, %v2350
  %v2488 = vmul.f32 %v2208, %v2350
  %v2489 = vmul.f32 %v2209, %v2355
  %v2490 = vmul.f32 %v2210, %v2355
  %v2491 = vmul.f32 %v2211, %v2360
  %v2492 = vmul.f32 %v2212, %v2360
  %v2493 = vmul.f32 %v2213, %v2365
  %v2494 = vmul.f32 %v2214, %v2365
  %v2495 = vmul.f32 %v2215, %v2370
  %v2496 = vmul.f32 %v2216, %v2370
  %v2497 = vmul.f32 %v2217, %v2375
  %v2498 = vmul.f32 %v2218, %v2375
  %v2499 = vmul.f32 %v2219, %v2380
  %v2500 = vmul.f32 %v2220, %v2380
  %v2501 = vmul.f32 %v2221, %v2385
  %v2502 = vmul.f32 %v2222, %v2385
  %v2503 = vmul.f32 %v2223, %v2390
  %v2504 = vmul.f32 %v2224, %v2390
  %v2505 = vmul.f32 %v2225, %v2395
  %v2506 = vmul.f32 %v2226, %v2395
  %v2507 = vmul.f32 %v2227, %v2400
  %v2508 = vmul.f32 %v2228, %v2400
  %v2509 = vmul.f32 %v2229, %v2405
  %v2510 = vmul.f32 %v2230, %v2405
  %v2511 = vmul.f32 %v2231, %v2410
  %v2512 = vmul.f32 %v2232, %v2410
  %v2513 = vmul.f32 %v2233, %v2415
  %v2514 = vmul.f32 %v2234, %v2415
  %v2515 = vmul.f32 %v2235, %v2420
  %v2516 = vmul.f32 %v2236, %v2420
  %v2517 = vmul.f32 %v2237, %v2425
  %v2518 = vmul.f32 %v2238, %v2425
  %v2519 = vmul.f32 %v2239, %v2430
  %v2520 = vmul.f32 %v2240, %v2430
  %v2521 = vmul.f32 %v2241, %v2435
  %v2522 = vmul.f32 %v2242, %v2435
  %v2523 = vmul.f32 %v2243, %v2440
  %v2524 = vmul.f32 %v2244, %v2440
  %v2525 = vmul.f32 %v2245, %v2445
  %v2526 = vmul.f32 %v2246, %v2445
  %2528 = vset.pattern.permute.xlu0 0
  %2529 = vperm.xlu0 %2528, %v2127
  %v2530 = vpop.permute.xlu0 %2529
  %2533 = vset.pattern.permute.xlu0 0
  %2534 = vperm.xlu0 %2533, %v2128
  %v2535 = vpop.permute.xlu0 %2534
  %2538 = vset.pattern.permute.xlu0 0
  %2539 = vperm.xlu0 %2538, %v2129
  %v2540 = vpop.permute.xlu0 %2539
  %2543 = vset.pattern.permute.xlu0 0
  %2544 = vperm.xlu0 %2543, %v2130
  %v2545 = vpop.permute.xlu0 %2544
  %2548 = vset.pattern.permute.xlu0 0
  %2549 = vperm.xlu0 %2548, %v2131
  %v2550 = vpop.permute.xlu0 %2549
  %2553 = vset.pattern.permute.xlu0 0
  %2554 = vperm.xlu0 %2553, %v2132
  %v2555 = vpop.permute.xlu0 %2554
  %2558 = vset.pattern.permute.xlu0 0
  %2559 = vperm.xlu0 %2558, %v2133
  %v2560 = vpop.permute.xlu0 %2559
  %2563 = vset.pattern.permute.xlu0 0
  %2564 = vperm.xlu0 %2563, %v2134
  %v2565 = vpop.permute.xlu0 %2564
  %2568 = vset.pattern.permute.xlu0 0
  %2569 = vperm.xlu0 %2568, %v2135
  %v2570 = vpop.permute.xlu0 %2569
  %2573 = vset.pattern.permute.xlu0 0
  %2574 = vperm.xlu0 %2573, %v2136
  %v2575 = vpop.permute.xlu0 %2574
  %2578 = vset.pattern.permute.xlu0 0
  %2579 = vperm.xlu0 %2578, %v2137
  %v2580 = vpop.permute.xlu0 %2579
  %2583 = vset.pattern.permute.xlu0 0
  %2584 = vperm.xlu0 %2583, %v2138
  %v2585 = vpop.permute.xlu0 %2584
  %2588 = vset.pattern.permute.xlu0 0
  %2589 = vperm.xlu0 %2588, %v2139
  %v2590 = vpop.permute.xlu0 %2589
  %2593 = vset.pattern.permute.xlu0 0
  %2594 = vperm.xlu0 %2593, %v2140
  %v2595 = vpop.permute.xlu0 %2594
  %2598 = vset.pattern.permute.xlu0 0
  %2599 = vperm.xlu0 %2598, %v2141
  %v2600 = vpop.permute.xlu0 %2599
  %2603 = vset.pattern.permute.xlu0 0
  %2604 = vperm.xlu0 %2603, %v2142
  %v2605 = vpop.permute.xlu0 %2604
  %2608 = vset.pattern.permute.xlu0 0
  %2609 = vperm.xlu0 %2608, %v2143
  %v2610 = vpop.permute.xlu0 %2609
  %2613 = vset.pattern.permute.xlu0 0
  %2614 = vperm.xlu0 %2613, %v2144
  %v2615 = vpop.permute.xlu0 %2614
  %2618 = vset.pattern.permute.xlu0 0
  %2619 = vperm.xlu0 %2618, %v2145
  %v2620 = vpop.permute.xlu0 %2619
  %2623 = vset.pattern.permute.xlu0 0
  %2624 = vperm.xlu0 %2623, %v2146
  %v2625 = vpop.permute.xlu0 %2624
  %2628 = vset.pattern.permute.xlu0 0
  %2629 = vperm.xlu0 %2628, %v2147
  %v2630 = vpop.permute.xlu0 %2629
  %2633 = vset.pattern.permute.xlu0 0
  %2634 = vperm.xlu0 %2633, %v2148
  %v2635 = vpop.permute.xlu0 %2634
  %2638 = vset.pattern.permute.xlu0 0
  %2639 = vperm.xlu0 %2638, %v2149
  %v2640 = vpop.permute.xlu0 %2639
  %2643 = vset.pattern.permute.xlu0 0
  %2644 = vperm.xlu0 %2643, %v2150
  %v2645 = vpop.permute.xlu0 %2644
  %2648 = vset.pattern.permute.xlu0 0
  %2649 = vperm.xlu0 %2648, %v2151
  %v2650 = vpop.permute.xlu0 %2649
  %2653 = vset.pattern.permute.xlu0 0
  %2654 = vperm.xlu0 %2653, %v2152
  %v2655 = vpop.permute.xlu0 %2654
  %2658 = vset.pattern.permute.xlu0 0
  %2659 = vperm.xlu0 %2658, %v2153
  %v2660 = vpop.permute.xlu0 %2659
  %2663 = vset.pattern.permute.xlu0 0
  %2664 = vperm.xlu0 %2663, %v2154
  %v2665 = vpop.permute.xlu0 %2664
  %2668 = vset.pattern.permute.xlu0 0
  %2669 = vperm.xlu0 %2668, %v2155
  %v2670 = vpop.permute.xlu0 %2669
  %2673 = vset.pattern.permute.xlu0 0
  %2674 = vperm.xlu0 %2673, %v2156
  %v2675 = vpop.permute.xlu0 %2674
  %2678 = vset.pattern.permute.xlu0 0
  %2679 = vperm.xlu0 %2678, %v2157
  %v2680 = vpop.permute.xlu0 %2679
  %2683 = vset.pattern.permute.xlu0 0
  %2684 = vperm.xlu0 %2683, %v2158
  %v2685 = vpop.permute.xlu0 %2684
  %2688 = vset.pattern.permute.xlu0 0
  %2689 = vperm.xlu0 %2688, %v2159
  %v2690 = vpop.permute.xlu0 %2689
  %2693 = vset.pattern.permute.xlu0 0
  %2694 = vperm.xlu0 %2693, %v2160
  %v2695 = vpop.permute.xlu0 %2694
  %2698 = vset.pattern.permute.xlu0 0
  %2699 = vperm.xlu0 %2698, %v2161
  %v2700 = vpop.permute.xlu0 %2699
  %2703 = vset.pattern.permute.xlu0 0
  %2704 = vperm.xlu0 %2703, %v2162
  %v2705 = vpop.permute.xlu0 %2704
  %2708 = vset.pattern.permute.xlu0 0
  %2709 = vperm.xlu0 %2708, %v2163
  %v2710 = vpop.permute.xlu0 %2709
  %2713 = vset.pattern.permute.xlu0 0
  %2714 = vperm.xlu0 %2713, %v2164
  %v2715 = vpop.permute.xlu0 %2714
  %2718 = vset.pattern.permute.xlu0 0
  %2719 = vperm.xlu0 %2718, %v2165
  %v2720 = vpop.permute.xlu0 %2719
  %2723 = vset.pattern.permute.xlu0 0
  %2724 = vperm.xlu0 %2723, %v2166
  %v2725 = vpop.permute.xlu0 %2724
  %v2727 = vadd.f32 %v2447, %v2530
  %v2728 = vadd.f32 %v2448, %v2530
  %v2729 = vadd.f32 %v2449, %v2535
  %v2730 = vadd.f32 %v2450, %v2535
  %v2731 = vadd.f32 %v2451, %v2540
  %v2732 = vadd.f32 %v2452, %v2540
  %v2733 = vadd.f32 %v2453, %v2545
  %v2734 = vadd.f32 %v2454, %v2545
  %v2735 = vadd.f32 %v2455, %v2550
  %v2736 = vadd.f32 %v2456, %v2550
  %v2737 = vadd.f32 %v2457, %v2555
  %v2738 = vadd.f32 %v2458, %v2555
  %v2739 = vadd.f32 %v2459, %v2560
  %v2740 = vadd.f32 %v2460, %v2560
  %v2741 = vadd.f32 %v2461, %v2565
  %v2742 = vadd.f32 %v2462, %v2565
  %v2743 = vadd.f32 %v2463, %v2570
  %v2744 = vadd.f32 %v2464, %v2570
  %v2745 = vadd.f32 %v2465, %v2575
  %v2746 = vadd.f32 %v2466, %v2575
  %v2747 = vadd.f32 %v2467, %v2580
  %v2748 = vadd.f32 %v2468, %v2580
  %v2749 = vadd.f32 %v2469, %v2585
  %v2750 = vadd.f32 %v2470, %v2585
  %v2751 = vadd.f32 %v2471, %v2590
  %v2752 = vadd.f32 %v2472, %v2590
  %v2753 = vadd.f32 %v2473, %v2595
  %v2754 = vadd.f32 %v2474, %v2595
  %v2755 = vadd.f32 %v2475, %v2600
  %v2756 = vadd.f32 %v2476, %v2600
  %v2757 = vadd.f32 %v2477, %v2605
  %v2758 = vadd.f32 %v2478, %v2605
  %v2759 = vadd.f32 %v2479, %v2610
  %v2760 = vadd.f32 %v2480, %v2610
  %v2761 = vadd.f32 %v2481, %v2615
  %v2762 = vadd.f32 %v2482, %v2615
  %v2763 = vadd.f32 %v2483, %v2620
  %v2764 = vadd.f32 %v2484, %v2620
  %v2765 = vadd.f32 %v2485, %v2625
  %v2766 = vadd.f32 %v2486, %v2625
  %v2767 = vadd.f32 %v2487, %v2630
  %v2768 = vadd.f32 %v2488, %v2630
  %v2769 = vadd.f32 %v2489, %v2635
  %v2770 = vadd.f32 %v2490, %v2635
  %v2771 = vadd.f32 %v2491, %v2640
  %v2772 = vadd.f32 %v2492, %v2640
  %v2773 = vadd.f32 %v2493, %v2645
  %v2774 = vadd.f32 %v2494, %v2645
  %v2775 = vadd.f32 %v2495, %v2650
  %v2776 = vadd.f32 %v2496, %v2650
  %v2777 = vadd.f32 %v2497, %v2655
  %v2778 = vadd.f32 %v2498, %v2655
  %v2779 = vadd.f32 %v2499, %v2660
  %v2780 = vadd.f32 %v2500, %v2660
  %v2781 = vadd.f32 %v2501, %v2665
  %v2782 = vadd.f32 %v2502, %v2665
  %v2783 = vadd.f32 %v2503, %v2670
  %v2784 = vadd.f32 %v2504, %v2670
  %v2785 = vadd.f32 %v2505, %v2675
  %v2786 = vadd.f32 %v2506, %v2675
  %v2787 = vadd.f32 %v2507, %v2680
  %v2788 = vadd.f32 %v2508, %v2680
  %v2789 = vadd.f32 %v2509, %v2685
  %v2790 = vadd.f32 %v2510, %v2685
  %v2791 = vadd.f32 %v2511, %v2690
  %v2792 = vadd.f32 %v2512, %v2690
  %v2793 = vadd.f32 %v2513, %v2695
  %v2794 = vadd.f32 %v2514, %v2695
  %v2795 = vadd.f32 %v2515, %v2700
  %v2796 = vadd.f32 %v2516, %v2700
  %v2797 = vadd.f32 %v2517, %v2705
  %v2798 = vadd.f32 %v2518, %v2705
  %v2799 = vadd.f32 %v2519, %v2710
  %v2800 = vadd.f32 %v2520, %v2710
  %v2801 = vadd.f32 %v2521, %v2715
  %v2802 = vadd.f32 %v2522, %v2715
  %v2803 = vadd.f32 %v2523, %v2720
  %v2804 = vadd.f32 %v2524, %v2720
  %v2805 = vadd.f32 %v2525, %v2725
  %v2806 = vadd.f32 %v2526, %v2725
  %2807 = vst [vmem:[%s4] sm:$0xff] %v2727
  %2808 = vst.msk [vmem:[%s4 + $0x8] sm:$0xff] %vm1166, %v2728
  %2809 = vst [vmem:[%s4 + $0x10] sm:$0xff] %v2729
  %2810 = vst.msk [vmem:[%s4 + $0x18] sm:$0xff] %vm1166, %v2730
  %2811 = vst [vmem:[%s4 + $0x20] sm:$0xff] %v2731
  %2812 = vst.msk [vmem:[%s4 + $0x28] sm:$0xff] %vm1166, %v2732
  %2813 = vst [vmem:[%s4 + $0x30] sm:$0xff] %v2733
  %2814 = vst.msk [vmem:[%s4 + $0x38] sm:$0xff] %vm1166, %v2734
  %2815 = vst [vmem:[%s4 + $0x40] sm:$0xff] %v2735
  %2816 = vst.msk [vmem:[%s4 + $0x48] sm:$0xff] %vm1166, %v2736
  %2817 = vst [vmem:[%s4 + $0x50] sm:$0xff] %v2737
  %2818 = vst.msk [vmem:[%s4 + $0x58] sm:$0xff] %vm1166, %v2738
  %2819 = vst [vmem:[%s4 + $0x60] sm:$0xff] %v2739
  %2820 = vst.msk [vmem:[%s4 + $0x68] sm:$0xff] %vm1166, %v2740
  %2821 = vst [vmem:[%s4 + $0x70] sm:$0xff] %v2741
  %2822 = vst.msk [vmem:[%s4 + $0x78] sm:$0xff] %vm1166, %v2742
  %2823 = vst [vmem:[%s4 + $0x80] sm:$0xff] %v2743
  %2824 = vst.msk [vmem:[%s4 + $0x88] sm:$0xff] %vm1166, %v2744
  %2825 = vst [vmem:[%s4 + $0x90] sm:$0xff] %v2745
  %2826 = vst.msk [vmem:[%s4 + $0x98] sm:$0xff] %vm1166, %v2746
  %2827 = vst [vmem:[%s4 + $0xa0] sm:$0xff] %v2747
  %2828 = vst.msk [vmem:[%s4 + $0xa8] sm:$0xff] %vm1166, %v2748
  %2829 = vst [vmem:[%s4 + $0xb0] sm:$0xff] %v2749
  %2830 = vst.msk [vmem:[%s4 + $0xb8] sm:$0xff] %vm1166, %v2750
  %2831 = vst [vmem:[%s4 + $0xc0] sm:$0xff] %v2751
  %2832 = vst.msk [vmem:[%s4 + $0xc8] sm:$0xff] %vm1166, %v2752
  %2833 = vst [vmem:[%s4 + $0xd0] sm:$0xff] %v2753
  %2834 = vst.msk [vmem:[%s4 + $0xd8] sm:$0xff] %vm1166, %v2754
  %2835 = vst [vmem:[%s4 + $0xe0] sm:$0xff] %v2755
  %2836 = vst.msk [vmem:[%s4 + $0xe8] sm:$0xff] %vm1166, %v2756
  %2837 = vst [vmem:[%s4 + $0xf0] sm:$0xff] %v2757
  %2838 = vst.msk [vmem:[%s4 + $0xf8] sm:$0xff] %vm1166, %v2758
  %2839 = vst [vmem:[%s4 + $0x100] sm:$0xff] %v2759
  %2840 = vst.msk [vmem:[%s4 + $0x108] sm:$0xff] %vm1166, %v2760
  %2841 = vst [vmem:[%s4 + $0x110] sm:$0xff] %v2761
  %2842 = vst.msk [vmem:[%s4 + $0x118] sm:$0xff] %vm1166, %v2762
  %2843 = vst [vmem:[%s4 + $0x120] sm:$0xff] %v2763
  %2844 = vst.msk [vmem:[%s4 + $0x128] sm:$0xff] %vm1166, %v2764
  %2845 = vst [vmem:[%s4 + $0x130] sm:$0xff] %v2765
  %2846 = vst.msk [vmem:[%s4 + $0x138] sm:$0xff] %vm1166, %v2766
  %2847 = vst [vmem:[%s4 + $0x140] sm:$0xff] %v2767
  %2848 = vst.msk [vmem:[%s4 + $0x148] sm:$0xff] %vm1166, %v2768
  %2849 = vst [vmem:[%s4 + $0x150] sm:$0xff] %v2769
  %2850 = vst.msk [vmem:[%s4 + $0x158] sm:$0xff] %vm1166, %v2770
  %2851 = vst [vmem:[%s4 + $0x160] sm:$0xff] %v2771
  %2852 = vst.msk [vmem:[%s4 + $0x168] sm:$0xff] %vm1166, %v2772
  %2853 = vst [vmem:[%s4 + $0x170] sm:$0xff] %v2773
  %2854 = vst.msk [vmem:[%s4 + $0x178] sm:$0xff] %vm1166, %v2774
  %2855 = vst [vmem:[%s4 + $0x180] sm:$0xff] %v2775
  %2856 = vst.msk [vmem:[%s4 + $0x188] sm:$0xff] %vm1166, %v2776
  %2857 = vst [vmem:[%s4 + $0x190] sm:$0xff] %v2777
  %2858 = vst.msk [vmem:[%s4 + $0x198] sm:$0xff] %vm1166, %v2778
  %2859 = vst [vmem:[%s4 + $0x1a0] sm:$0xff] %v2779
  %2860 = vst.msk [vmem:[%s4 + $0x1a8] sm:$0xff] %vm1166, %v2780
  %2861 = vst [vmem:[%s4 + $0x1b0] sm:$0xff] %v2781
  %2862 = vst.msk [vmem:[%s4 + $0x1b8] sm:$0xff] %vm1166, %v2782
  %2863 = vst [vmem:[%s4 + $0x1c0] sm:$0xff] %v2783
  %2864 = vst.msk [vmem:[%s4 + $0x1c8] sm:$0xff] %vm1166, %v2784
  %2865 = vst [vmem:[%s4 + $0x1d0] sm:$0xff] %v2785
  %2866 = vst.msk [vmem:[%s4 + $0x1d8] sm:$0xff] %vm1166, %v2786
  %2867 = vst [vmem:[%s4 + $0x1e0] sm:$0xff] %v2787
  %2868 = vst.msk [vmem:[%s4 + $0x1e8] sm:$0xff] %vm1166, %v2788
  %2869 = vst [vmem:[%s4 + $0x1f0] sm:$0xff] %v2789
  %2870 = vst.msk [vmem:[%s4 + $0x1f8] sm:$0xff] %vm1166, %v2790
  %2871 = vst [vmem:[%s4 + $0x200] sm:$0xff] %v2791
  %2872 = vst.msk [vmem:[%s4 + $0x208] sm:$0xff] %vm1166, %v2792
  %2873 = vst [vmem:[%s4 + $0x210] sm:$0xff] %v2793
  %2874 = vst.msk [vmem:[%s4 + $0x218] sm:$0xff] %vm1166, %v2794
  %2875 = vst [vmem:[%s4 + $0x220] sm:$0xff] %v2795
  %2876 = vst.msk [vmem:[%s4 + $0x228] sm:$0xff] %vm1166, %v2796
  %2877 = vst [vmem:[%s4 + $0x230] sm:$0xff] %v2797
  %2878 = vst.msk [vmem:[%s4 + $0x238] sm:$0xff] %vm1166, %v2798
  %2879 = vst [vmem:[%s4 + $0x240] sm:$0xff] %v2799
  %2880 = vst.msk [vmem:[%s4 + $0x248] sm:$0xff] %vm1166, %v2800
  %2881 = vst [vmem:[%s4 + $0x250] sm:$0xff] %v2801
  %2882 = vst.msk [vmem:[%s4 + $0x258] sm:$0xff] %vm1166, %v2802
  %2883 = vst [vmem:[%s4 + $0x260] sm:$0xff] %v2803
  %2884 = vst.msk [vmem:[%s4 + $0x268] sm:$0xff] %vm1166, %v2804
  %2885 = vst [vmem:[%s4 + $0x270] sm:$0xff] %v2805
  %2886 = vst.msk [vmem:[%s4 + $0x278] sm:$0xff] %vm1166, %v2806
  // Predicated region
  $region18: #{conv1x1_bn.1} parent=0 // pred_check
    _
  $region19: #{conv1x1_bn.1} parent=0 // pred_check_branch
    %2888 = sbr.rel (0) target = $region21
  $region20: #{conv1x1_bn.1} parent=0 // pred_region
    _
  $region21: #{conv1x1_bn.1} parent=0 // pred_fallthru
    _
  // Predicated region
  $region22: #{conv1x1_bn.1} parent=0 // pred_check
    _
  $region23: #{conv1x1_bn.1} parent=0 // pred_check_branch
    %2890 = sbr.rel (0) target = $region25
  $region24: #{conv1x1_bn.1} parent=0 // pred_region
    _
  $region25: #{conv1x1_bn.1} parent=0 // pred_fallthru
    _

</llo_original>
